<compile_context>
chip_gen: v6e
topology: v6e:2x2x1
jax: 0.10.0
libtpu: 0.0.40
codegen_flags: <defaults>
</compile_context>

<pallas_src>
import math
import functools

import jax
import jax.numpy as jnp
from jax.experimental import pallas as pl
from jax.experimental.pallas import tpu as pltpu


def mab_kernel(q_ref, k_ref,
               wq_ref, bq_ref, wkv_ref, bkv_ref, wo_ref, bo_ref,
               o_ref, *, num_heads):
    Bt, Nq, dim_Q = q_ref.shape
    _, Nk, dim_K = k_ref.shape
    dim_V = wq_ref.shape[1]
    d = dim_V // num_heads
    scale = 1.0 / math.sqrt(dim_V)  # PyTorch MAB scales by sqrt(dim_V), not sqrt(d)

    # Flatten (Bt, N, feat) -> (Bt*N, feat); tile-aligned when N % 8 == 0.
    Qf = q_ref[...].reshape(Bt * Nq, dim_Q).astype(jnp.float32)
    Kf = k_ref[...].reshape(Bt * Nk, dim_K).astype(jnp.float32)

    # Hoisted bias reads (each used exactly once).
    bq = bq_ref[...].astype(jnp.float32)    # (1, dim_V)
    bkv = bkv_ref[...].astype(jnp.float32)  # (1, 2*dim_V)
    bo = bo_ref[...].astype(jnp.float32)    # (1, dim_V)

    # Projections: one matmul for Q, one fused matmul for K and V.
    Qp = jnp.dot(Qf, wq_ref[...], preferred_element_type=jnp.float32) + bq     # (Bt*Nq, dim_V)
    KVp = jnp.dot(Kf, wkv_ref[...], preferred_element_type=jnp.float32) + bkv  # (Bt*Nk, 2*dim_V)

    Qp3 = Qp.reshape(Bt, Nq, dim_V)
    KVp3 = KVp.reshape(Bt, Nk, 2 * dim_V)

    head_outs = []
    for h in range(num_heads):  # static, unrolled; H is small
        qh = Qp3[:, :, h * d:(h + 1) * d]                          # (Bt, Nq, d)
        kh = KVp3[:, :, h * d:(h + 1) * d]                         # (Bt, Nk, d)
        vh = KVp3[:, :, dim_V + h * d: dim_V + (h + 1) * d]        # (Bt, Nk, d)

        # Batched (over Bt) attention for this head.
        s = jnp.einsum('bqd,bkd->bqk', qh, kh,
                       preferred_element_type=jnp.float32) * scale  # (Bt, Nq, Nk)
        s = s - jnp.max(s, axis=-1, keepdims=True)
        e = jnp.exp(s)
        inv_denom = pl.reciprocal(jnp.sum(e, axis=-1, keepdims=True), approx=True)
        a = e * inv_denom                                           # softmax over Nk (EUP divide)

        head_outs.append(qh + jnp.einsum('bqk,bkd->bqd', a, vh,
                                         preferred_element_type=jnp.float32))

    O = jnp.concatenate(head_outs, axis=-1)            # (Bt, Nq, dim_V)
    Of = O.reshape(Bt * Nq, dim_V)

    fc = jnp.dot(Of, wo_ref[...], preferred_element_type=jnp.float32) + bo
    out = Of + jnp.maximum(fc, 0.0)                    # O + relu(fc_o(O))

    o_ref[...] = out.reshape(Bt, Nq, dim_V).astype(o_ref.dtype)


def _pick_batch_block(B):
    # Prefer a 2-step "parallel" grid (one block per TensorCore on v7x) when
    # each step still gets Bt > 1 batch elements; otherwise collapse to a
    # single step so the per-grid-step overhead is fully amortized (v5e/v6e
    # have a single TensorCore, so grid=(1,) is strictly best there).
    if B >= 4 and B % 2 == 0:
        return B // 2
    return B


def mab_forward(Q, K, params, *, num_heads):
    B, Nq, dim_Q = Q.shape
    Bk, Nk, dim_K = K.shape
    assert Bk == B
    dim_V = params["wq"].shape[1]
    assert dim_V % num_heads == 0

    Bt = _pick_batch_block(B)
    num_blocks = B // Bt

    # Fuse the K-path projections wrapper-side (free): (dim_K, 2*dim_V).
    wkv = jnp.concatenate([params["wk"], params["wv"]], axis=1)
    bkv = jnp.concatenate([params["bk"], params["bv"]], axis=1)

    kernel = functools.partial(mab_kernel, num_heads=num_heads)

    def full_spec(shp):
        return pl.BlockSpec(shp, lambda b: (0,) * len(shp))

    return pl.pallas_call(
        kernel,
        out_shape=jax.ShapeDtypeStruct((B, Nq, dim_V), Q.dtype),
        grid=(num_blocks,),
        in_specs=[
            pl.BlockSpec((Bt, Nq, dim_Q), lambda b: (b, 0, 0)),
            pl.BlockSpec((Bt, Nk, dim_K), lambda b: (b, 0, 0)),
            full_spec((dim_Q, dim_V)), full_spec((1, dim_V)),        # fc_q
            full_spec((dim_K, 2 * dim_V)), full_spec((1, 2 * dim_V)),  # fc_k|fc_v fused
            full_spec((dim_V, dim_V)), full_spec((1, dim_V)),        # fc_o
        ],
        out_specs=pl.BlockSpec((Bt, Nq, dim_V), lambda b: (b, 0, 0)),
        compiler_params=pltpu.CompilerParams(dimension_semantics=("parallel",)),
    )(Q, K,
      params["wq"], params["bq"],
      wkv, bkv,
      params["wo"], params["bo"])


def mab_reference(Q, K, params, *, num_heads):
    # Pure-JAX reference mirroring the PyTorch forward exactly.
    dim_V = params["wq"].shape[1]
    Qp = Q @ params["wq"] + params["bq"][0]
    Kp = K @ params["wk"] + params["bk"][0]
    Vp = K @ params["wv"] + params["bv"][0]
    Q_ = jnp.concatenate(jnp.split(Qp, num_heads, axis=2), axis=0)
    K_ = jnp.concatenate(jnp.split(Kp, num_heads, axis=2), axis=0)
    V_ = jnp.concatenate(jnp.split(Vp, num_heads, axis=2), axis=0)
    A = jax.nn.softmax(jnp.einsum("bqd,bkd->bqk", Q_, K_) / math.sqrt(dim_V), axis=2)
    O = Q_ + jnp.einsum("bqk,bkd->bqd", A, V_)
    O = jnp.concatenate(jnp.split(O, num_heads, axis=0), axis=2)
    fc = O @ params["wo"] + params["bo"][0]
    return O + jnp.maximum(fc, 0.0)


if __name__ == "__main__":
    B, Nq, Nk = 4, 8, 16
    dim_Q, dim_K, dim_V, num_heads = 16, 24, 32, 4

    key = jax.random.PRNGKey(0)
    ks = jax.random.split(key, 10)

    Q = jax.random.normal(ks[0], (B, Nq, dim_Q), dtype=jnp.float32)
    K = jax.random.normal(ks[1], (B, Nk, dim_K), dtype=jnp.float32)

    def linear_init(kw, kb, fan_in, fan_out):
        bound = 1.0 / math.sqrt(fan_in)
        w = jax.random.uniform(kw, (fan_in, fan_out), minval=-bound, maxval=bound,
                               dtype=jnp.float32)
        b = jax.random.uniform(kb, (1, fan_out), minval=-bound, maxval=bound,
                               dtype=jnp.float32)
        return w, b

    wq, bq = linear_init(ks[2], ks[3], dim_Q, dim_V)
    wk, bk = linear_init(ks[4], ks[5], dim_K, dim_V)
    wv, bv = linear_init(ks[6], ks[7], dim_K, dim_V)
    wo, bo = linear_init(ks[8], ks[9], dim_V, dim_V)

    params = dict(wq=wq, bq=bq, wk=wk, bk=bk, wv=wv, bv=bv, wo=wo, bo=bo)

    out = mab_forward(Q, K, params, num_heads=num_heads)
    out = jax.block_until_ready(out)

    ref = mab_reference(Q, K, params, num_heads=num_heads)
    assert out.shape == (B, Nq, dim_V)
    # Tolerance accounts for the EUP approximate-reciprocal softmax divide.
    assert jnp.allclose(out, ref, atol=1e-2, rtol=1e-2)

    print("KERNEL_OK")
</pallas_src>

<mosaic_0001>
module attributes {stable_mosaic.version = 11 : i64} {
  func.func @mab_kernel(%arg0: i32, %arg1: memref<2x8x16xf32, #tpu.memory_space<vmem>>, %arg2: memref<2x16x24xf32, #tpu.memory_space<vmem>>, %arg3: memref<16x32xf32, #tpu.memory_space<vmem>>, %arg4: memref<1x32xf32, #tpu.memory_space<vmem>>, %arg5: memref<24x64xf32, #tpu.memory_space<vmem>>, %arg6: memref<1x64xf32, #tpu.memory_space<vmem>>, %arg7: memref<32x32xf32, #tpu.memory_space<vmem>>, %arg8: memref<1x32xf32, #tpu.memory_space<vmem>>, %arg9: memref<2x8x32xf32, #tpu.memory_space<vmem>>) attributes {dimension_semantics = [#tpu.dimension_semantics<parallel>], iteration_bounds = array<i64: 2>, scalar_prefetch = 0 : i64, scratch_operands = 0 : i64, tpu.core_type = #tpu.core_type<tc>, window_params = [{transform_indices = @transform_0, window_bounds = array<i64: 2, 8, 16>}, {transform_indices = @transform_1, window_bounds = array<i64: 2, 16, 24>}, {pipeline_mode = #tpu.pipeline_mode<synchronous>, transform_indices = @transform_2, window_bounds = array<i64: 16, 32>}, {pipeline_mode = #tpu.pipeline_mode<synchronous>, transform_indices = @transform_3, window_bounds = array<i64: 1, 32>}, {pipeline_mode = #tpu.pipeline_mode<synchronous>, transform_indices = @transform_4, window_bounds = array<i64: 24, 64>}, {pipeline_mode = #tpu.pipeline_mode<synchronous>, transform_indices = @transform_5, window_bounds = array<i64: 1, 64>}, {pipeline_mode = #tpu.pipeline_mode<synchronous>, transform_indices = @transform_6, window_bounds = array<i64: 32, 32>}, {pipeline_mode = #tpu.pipeline_mode<synchronous>, transform_indices = @transform_7, window_bounds = array<i64: 1, 32>}, {transform_indices = @transform_8, window_bounds = array<i64: 2, 8, 32>}]} {
    %c0 = arith.constant 0 : index
    %c0_0 = arith.constant 0 : index
    %c0_1 = arith.constant 0 : index
    %0 = vector.load %arg1[%c0, %c0_0, %c0_1] : memref<2x8x16xf32, #tpu.memory_space<vmem>>, vector<2x8x16xf32>
    %1 = vector.shape_cast %0 : vector<2x8x16xf32> to vector<16x16xf32>
    %c0_2 = arith.constant 0 : index
    %c0_3 = arith.constant 0 : index
    %c0_4 = arith.constant 0 : index
    %2 = vector.load %arg2[%c0_2, %c0_3, %c0_4] : memref<2x16x24xf32, #tpu.memory_space<vmem>>, vector<2x16x24xf32>
    %3 = vector.shape_cast %2 : vector<2x16x24xf32> to vector<32x24xf32>
    %c0_5 = arith.constant 0 : index
    %c0_6 = arith.constant 0 : index
    %4 = vector.load %arg4[%c0_5, %c0_6] : memref<1x32xf32, #tpu.memory_space<vmem>>, vector<1x32xf32>
    %c0_7 = arith.constant 0 : index
    %c0_8 = arith.constant 0 : index
    %5 = vector.load %arg6[%c0_7, %c0_8] : memref<1x64xf32, #tpu.memory_space<vmem>>, vector<1x64xf32>
    %c0_9 = arith.constant 0 : index
    %c0_10 = arith.constant 0 : index
    %6 = vector.load %arg8[%c0_9, %c0_10] : memref<1x32xf32, #tpu.memory_space<vmem>>, vector<1x32xf32>
    %c0_11 = arith.constant 0 : index
    %c0_12 = arith.constant 0 : index
    %7 = vector.load %arg3[%c0_11, %c0_12] : memref<16x32xf32, #tpu.memory_space<vmem>>, vector<16x32xf32>
    %cst = arith.constant dense<0.000000e+00> : vector<16x32xf32>
    %8 = tpu.matmul %1, %7, %cst {dimension_numbers = #tpu.dot_dimension_numbers<[1], [0], [0], [1], [0, 0, 1, 1], [], []>} : vector<16x16xf32>, vector<16x32xf32>, vector<16x32xf32> -> vector<16x32xf32>
    %9 = vector.broadcast %4 : vector<1x32xf32> to vector<16x32xf32>
    %10 = arith.addf %8, %9 : vector<16x32xf32>
    %c0_13 = arith.constant 0 : index
    %c0_14 = arith.constant 0 : index
    %11 = vector.load %arg5[%c0_13, %c0_14] : memref<24x64xf32, #tpu.memory_space<vmem>>, vector<24x64xf32>
    %cst_15 = arith.constant dense<0.000000e+00> : vector<32x64xf32>
    %12 = tpu.matmul %3, %11, %cst_15 {dimension_numbers = #tpu.dot_dimension_numbers<[1], [0], [0], [1], [0, 0, 1, 1], [], []>} : vector<32x24xf32>, vector<24x64xf32>, vector<32x64xf32> -> vector<32x64xf32>
    %13 = vector.broadcast %5 : vector<1x64xf32> to vector<32x64xf32>
    %14 = arith.addf %12, %13 : vector<32x64xf32>
    %15 = vector.shape_cast %10 : vector<16x32xf32> to vector<2x8x32xf32>
    %16 = vector.shape_cast %14 : vector<32x64xf32> to vector<2x16x64xf32>
    %17 = vector.extract_strided_slice %15 {offsets = [0, 0, 0], sizes = [2, 8, 8], strides = [1, 1, 1]} : vector<2x8x32xf32> to vector<2x8x8xf32>
    %18 = vector.extract_strided_slice %16 {offsets = [0, 0, 0], sizes = [2, 16, 8], strides = [1, 1, 1]} : vector<2x16x64xf32> to vector<2x16x8xf32>
    %19 = vector.extract_strided_slice %16 {offsets = [0, 0, 32], sizes = [2, 16, 8], strides = [1, 1, 1]} : vector<2x16x64xf32> to vector<2x16x8xf32>
    "tpu.trace_start"() <{level = 10 : i32, message = "bqd,bkd->bqk"}> : () -> ()
    %cst_16 = arith.constant dense<0.000000e+00> : vector<2x8x16xf32>
    %20 = tpu.matmul %17, %18, %cst_16 {dimension_numbers = #tpu.dot_dimension_numbers<[2], [2], [1], [1], [0, 0, 0, 1, 1, 1], [0], [0]>} : vector<2x8x8xf32>, vector<2x16x8xf32>, vector<2x8x16xf32> -> vector<2x8x16xf32>
    "tpu.trace_stop"() : () -> ()
    %cst_17 = arith.constant 0.176776692 : f32
    %21 = vector.broadcast %cst_17 : f32 to vector<2x8x16xf32>
    %22 = arith.mulf %20, %21 : vector<2x8x16xf32>
    %cst_18 = arith.constant dense<0xFF800000> : vector<2x8xf32>
    %23 = vector.multi_reduction <maximumf>, %22, %cst_18 [2] : vector<2x8x16xf32> to vector<2x8xf32>
    %24 = vector.shape_cast %23 : vector<2x8xf32> to vector<2x8x1xf32>
    %25 = vector.broadcast %24 : vector<2x8x1xf32> to vector<2x8x16xf32>
    %26 = arith.subf %22, %25 : vector<2x8x16xf32>
    %27 = math.exp %26 : vector<2x8x16xf32>
    %cst_19 = arith.constant dense<0.000000e+00> : vector<2x8xf32>
    %28 = vector.multi_reduction <add>, %27, %cst_19 [2] : vector<2x8x16xf32> to vector<2x8xf32>
    %29 = vector.shape_cast %28 : vector<2x8xf32> to vector<2x8x1xf32>
    %30 = tpu.reciprocal %29 {approx = true} : vector<2x8x1xf32> -> vector<2x8x1xf32>
    %31 = vector.broadcast %30 : vector<2x8x1xf32> to vector<2x8x16xf32>
    %32 = arith.mulf %27, %31 : vector<2x8x16xf32>
    "tpu.trace_start"() <{level = 10 : i32, message = "bqk,bkd->bqd"}> : () -> ()
    %cst_20 = arith.constant dense<0.000000e+00> : vector<2x8x8xf32>
    %33 = tpu.matmul %32, %19, %cst_20 {dimension_numbers = #tpu.dot_dimension_numbers<[2], [1], [1], [2], [0, 0, 0, 1, 1, 2], [0], [0]>} : vector<2x8x16xf32>, vector<2x16x8xf32>, vector<2x8x8xf32> -> vector<2x8x8xf32>
    "tpu.trace_stop"() : () -> ()
    %34 = arith.addf %17, %33 : vector<2x8x8xf32>
    %35 = vector.extract_strided_slice %15 {offsets = [0, 0, 8], sizes = [2, 8, 8], strides = [1, 1, 1]} : vector<2x8x32xf32> to vector<2x8x8xf32>
    %36 = vector.extract_strided_slice %16 {offsets = [0, 0, 8], sizes = [2, 16, 8], strides = [1, 1, 1]} : vector<2x16x64xf32> to vector<2x16x8xf32>
    %37 = vector.extract_strided_slice %16 {offsets = [0, 0, 40], sizes = [2, 16, 8], strides = [1, 1, 1]} : vector<2x16x64xf32> to vector<2x16x8xf32>
    "tpu.trace_start"() <{level = 10 : i32, message = "bqd,bkd->bqk"}> : () -> ()
    %cst_21 = arith.constant dense<0.000000e+00> : vector<2x8x16xf32>
    %38 = tpu.matmul %35, %36, %cst_21 {dimension_numbers = #tpu.dot_dimension_numbers<[2], [2], [1], [1], [0, 0, 0, 1, 1, 1], [0], [0]>} : vector<2x8x8xf32>, vector<2x16x8xf32>, vector<2x8x16xf32> -> vector<2x8x16xf32>
    "tpu.trace_stop"() : () -> ()
    %cst_22 = arith.constant 0.176776692 : f32
    %39 = vector.broadcast %cst_22 : f32 to vector<2x8x16xf32>
    %40 = arith.mulf %38, %39 : vector<2x8x16xf32>
    %cst_23 = arith.constant dense<0xFF800000> : vector<2x8xf32>
    %41 = vector.multi_reduction <maximumf>, %40, %cst_23 [2] : vector<2x8x16xf32> to vector<2x8xf32>
    %42 = vector.shape_cast %41 : vector<2x8xf32> to vector<2x8x1xf32>
    %43 = vector.broadcast %42 : vector<2x8x1xf32> to vector<2x8x16xf32>
    %44 = arith.subf %40, %43 : vector<2x8x16xf32>
    %45 = math.exp %44 : vector<2x8x16xf32>
    %cst_24 = arith.constant dense<0.000000e+00> : vector<2x8xf32>
    %46 = vector.multi_reduction <add>, %45, %cst_24 [2] : vector<2x8x16xf32> to vector<2x8xf32>
    %47 = vector.shape_cast %46 : vector<2x8xf32> to vector<2x8x1xf32>
    %48 = tpu.reciprocal %47 {approx = true} : vector<2x8x1xf32> -> vector<2x8x1xf32>
    %49 = vector.broadcast %48 : vector<2x8x1xf32> to vector<2x8x16xf32>
    %50 = arith.mulf %45, %49 : vector<2x8x16xf32>
    "tpu.trace_start"() <{level = 10 : i32, message = "bqk,bkd->bqd"}> : () -> ()
    %cst_25 = arith.constant dense<0.000000e+00> : vector<2x8x8xf32>
    %51 = tpu.matmul %50, %37, %cst_25 {dimension_numbers = #tpu.dot_dimension_numbers<[2], [1], [1], [2], [0, 0, 0, 1, 1, 2], [0], [0]>} : vector<2x8x16xf32>, vector<2x16x8xf32>, vector<2x8x8xf32> -> vector<2x8x8xf32>
    "tpu.trace_stop"() : () -> ()
    %52 = arith.addf %35, %51 : vector<2x8x8xf32>
    %53 = vector.extract_strided_slice %15 {offsets = [0, 0, 16], sizes = [2, 8, 8], strides = [1, 1, 1]} : vector<2x8x32xf32> to vector<2x8x8xf32>
    %54 = vector.extract_strided_slice %16 {offsets = [0, 0, 16], sizes = [2, 16, 8], strides = [1, 1, 1]} : vector<2x16x64xf32> to vector<2x16x8xf32>
    %55 = vector.extract_strided_slice %16 {offsets = [0, 0, 48], sizes = [2, 16, 8], strides = [1, 1, 1]} : vector<2x16x64xf32> to vector<2x16x8xf32>
    "tpu.trace_start"() <{level = 10 : i32, message = "bqd,bkd->bqk"}> : () -> ()
    %cst_26 = arith.constant dense<0.000000e+00> : vector<2x8x16xf32>
    %56 = tpu.matmul %53, %54, %cst_26 {dimension_numbers = #tpu.dot_dimension_numbers<[2], [2], [1], [1], [0, 0, 0, 1, 1, 1], [0], [0]>} : vector<2x8x8xf32>, vector<2x16x8xf32>, vector<2x8x16xf32> -> vector<2x8x16xf32>
    "tpu.trace_stop"() : () -> ()
    %cst_27 = arith.constant 0.176776692 : f32
    %57 = vector.broadcast %cst_27 : f32 to vector<2x8x16xf32>
    %58 = arith.mulf %56, %57 : vector<2x8x16xf32>
    %cst_28 = arith.constant dense<0xFF800000> : vector<2x8xf32>
    %59 = vector.multi_reduction <maximumf>, %58, %cst_28 [2] : vector<2x8x16xf32> to vector<2x8xf32>
    %60 = vector.shape_cast %59 : vector<2x8xf32> to vector<2x8x1xf32>
    %61 = vector.broadcast %60 : vector<2x8x1xf32> to vector<2x8x16xf32>
    %62 = arith.subf %58, %61 : vector<2x8x16xf32>
    %63 = math.exp %62 : vector<2x8x16xf32>
    %cst_29 = arith.constant dense<0.000000e+00> : vector<2x8xf32>
    %64 = vector.multi_reduction <add>, %63, %cst_29 [2] : vector<2x8x16xf32> to vector<2x8xf32>
    %65 = vector.shape_cast %64 : vector<2x8xf32> to vector<2x8x1xf32>
    %66 = tpu.reciprocal %65 {approx = true} : vector<2x8x1xf32> -> vector<2x8x1xf32>
    %67 = vector.broadcast %66 : vector<2x8x1xf32> to vector<2x8x16xf32>
    %68 = arith.mulf %63, %67 : vector<2x8x16xf32>
    "tpu.trace_start"() <{level = 10 : i32, message = "bqk,bkd->bqd"}> : () -> ()
    %cst_30 = arith.constant dense<0.000000e+00> : vector<2x8x8xf32>
    %69 = tpu.matmul %68, %55, %cst_30 {dimension_numbers = #tpu.dot_dimension_numbers<[2], [1], [1], [2], [0, 0, 0, 1, 1, 2], [0], [0]>} : vector<2x8x16xf32>, vector<2x16x8xf32>, vector<2x8x8xf32> -> vector<2x8x8xf32>
    "tpu.trace_stop"() : () -> ()
    %70 = arith.addf %53, %69 : vector<2x8x8xf32>
    %71 = vector.extract_strided_slice %15 {offsets = [0, 0, 24], sizes = [2, 8, 8], strides = [1, 1, 1]} : vector<2x8x32xf32> to vector<2x8x8xf32>
    %72 = vector.extract_strided_slice %16 {offsets = [0, 0, 24], sizes = [2, 16, 8], strides = [1, 1, 1]} : vector<2x16x64xf32> to vector<2x16x8xf32>
    %73 = vector.extract_strided_slice %16 {offsets = [0, 0, 56], sizes = [2, 16, 8], strides = [1, 1, 1]} : vector<2x16x64xf32> to vector<2x16x8xf32>
    "tpu.trace_start"() <{level = 10 : i32, message = "bqd,bkd->bqk"}> : () -> ()
    %cst_31 = arith.constant dense<0.000000e+00> : vector<2x8x16xf32>
    %74 = tpu.matmul %71, %72, %cst_31 {dimension_numbers = #tpu.dot_dimension_numbers<[2], [2], [1], [1], [0, 0, 0, 1, 1, 1], [0], [0]>} : vector<2x8x8xf32>, vector<2x16x8xf32>, vector<2x8x16xf32> -> vector<2x8x16xf32>
    "tpu.trace_stop"() : () -> ()
    %cst_32 = arith.constant 0.176776692 : f32
    %75 = vector.broadcast %cst_32 : f32 to vector<2x8x16xf32>
    %76 = arith.mulf %74, %75 : vector<2x8x16xf32>
    %cst_33 = arith.constant dense<0xFF800000> : vector<2x8xf32>
    %77 = vector.multi_reduction <maximumf>, %76, %cst_33 [2] : vector<2x8x16xf32> to vector<2x8xf32>
    %78 = vector.shape_cast %77 : vector<2x8xf32> to vector<2x8x1xf32>
    %79 = vector.broadcast %78 : vector<2x8x1xf32> to vector<2x8x16xf32>
    %80 = arith.subf %76, %79 : vector<2x8x16xf32>
    %81 = math.exp %80 : vector<2x8x16xf32>
    %cst_34 = arith.constant dense<0.000000e+00> : vector<2x8xf32>
    %82 = vector.multi_reduction <add>, %81, %cst_34 [2] : vector<2x8x16xf32> to vector<2x8xf32>
    %83 = vector.shape_cast %82 : vector<2x8xf32> to vector<2x8x1xf32>
    %84 = tpu.reciprocal %83 {approx = true} : vector<2x8x1xf32> -> vector<2x8x1xf32>
    %85 = vector.broadcast %84 : vector<2x8x1xf32> to vector<2x8x16xf32>
    %86 = arith.mulf %81, %85 : vector<2x8x16xf32>
    "tpu.trace_start"() <{level = 10 : i32, message = "bqk,bkd->bqd"}> : () -> ()
    %cst_35 = arith.constant dense<0.000000e+00> : vector<2x8x8xf32>
    %87 = tpu.matmul %86, %73, %cst_35 {dimension_numbers = #tpu.dot_dimension_numbers<[2], [1], [1], [2], [0, 0, 0, 1, 1, 2], [0], [0]>} : vector<2x8x16xf32>, vector<2x16x8xf32>, vector<2x8x8xf32> -> vector<2x8x8xf32>
    "tpu.trace_stop"() : () -> ()
    %88 = arith.addf %71, %87 : vector<2x8x8xf32>
    %89 = tpu.concatenate %34, %52, %70, %88 in 2 : vector<2x8x8xf32>, vector<2x8x8xf32>, vector<2x8x8xf32>, vector<2x8x8xf32> -> vector<2x8x32xf32>
    %90 = vector.shape_cast %89 : vector<2x8x32xf32> to vector<16x32xf32>
    %c0_36 = arith.constant 0 : index
    %c0_37 = arith.constant 0 : index
    %91 = vector.load %arg7[%c0_36, %c0_37] : memref<32x32xf32, #tpu.memory_space<vmem>>, vector<32x32xf32>
    %cst_38 = arith.constant dense<0.000000e+00> : vector<16x32xf32>
    %92 = tpu.matmul %90, %91, %cst_38 {dimension_numbers = #tpu.dot_dimension_numbers<[1], [0], [0], [1], [0, 0, 1, 1], [], []>} : vector<16x32xf32>, vector<32x32xf32>, vector<16x32xf32> -> vector<16x32xf32>
    %93 = vector.broadcast %6 : vector<1x32xf32> to vector<16x32xf32>
    %94 = arith.addf %92, %93 : vector<16x32xf32>
    %cst_39 = arith.constant 0.000000e+00 : f32
    %95 = vector.broadcast %cst_39 : f32 to vector<16x32xf32>
    %96 = arith.maximumf %94, %95 : vector<16x32xf32>
    %97 = arith.addf %90, %96 : vector<16x32xf32>
    %98 = vector.shape_cast %97 : vector<16x32xf32> to vector<2x8x32xf32>
    %c0_40 = arith.constant 0 : index
    %c0_41 = arith.constant 0 : index
    %c0_42 = arith.constant 0 : index
    %99 = vector.load %arg9[%c0_40, %c0_41, %c0_42] : memref<2x8x32xf32, #tpu.memory_space<vmem>>, vector<2x8x32xf32>
    tpu.vector_store %arg9[%c0_40, %c0_41, %c0_42], %98 {strides = array<i32>} : memref<2x8x32xf32, #tpu.memory_space<vmem>>, vector<2x8x32xf32>,
    return
  }
  func.func @transform_0(%arg0: i32) -> (i32, i32, i32) {
    %c0_i32 = arith.constant 0 : i32
    %c0_i32_0 = arith.constant 0 : i32
    %c0_i32_1 = arith.constant 0 : i32
    return %arg0, %c0_i32, %c0_i32_0 : i32, i32, i32
  }
  func.func @transform_1(%arg0: i32) -> (i32, i32, i32) {
    %c0_i32 = arith.constant 0 : i32
    %c0_i32_0 = arith.constant 0 : i32
    %c0_i32_1 = arith.constant 0 : i32
    return %arg0, %c0_i32, %c0_i32_0 : i32, i32, i32
  }
  func.func @transform_2(%arg0: i32) -> (i32, i32) {
    %c0_i32 = arith.constant 0 : i32
    %c0_i32_0 = arith.constant 0 : i32
    %c0_i32_1 = arith.constant 0 : i32
    return %c0_i32, %c0_i32_0 : i32, i32
  }
  func.func @transform_3(%arg0: i32) -> (i32, i32) {
    %c0_i32 = arith.constant 0 : i32
    %c0_i32_0 = arith.constant 0 : i32
    %c0_i32_1 = arith.constant 0 : i32
    return %c0_i32, %c0_i32_0 : i32, i32
  }
  func.func @transform_4(%arg0: i32) -> (i32, i32) {
    %c0_i32 = arith.constant 0 : i32
    %c0_i32_0 = arith.constant 0 : i32
    %c0_i32_1 = arith.constant 0 : i32
    return %c0_i32, %c0_i32_0 : i32, i32
  }
  func.func @transform_5(%arg0: i32) -> (i32, i32) {
    %c0_i32 = arith.constant 0 : i32
    %c0_i32_0 = arith.constant 0 : i32
    %c0_i32_1 = arith.constant 0 : i32
    return %c0_i32, %c0_i32_0 : i32, i32
  }
  func.func @transform_6(%arg0: i32) -> (i32, i32) {
    %c0_i32 = arith.constant 0 : i32
    %c0_i32_0 = arith.constant 0 : i32
    %c0_i32_1 = arith.constant 0 : i32
    return %c0_i32, %c0_i32_0 : i32, i32
  }
  func.func @transform_7(%arg0: i32) -> (i32, i32) {
    %c0_i32 = arith.constant 0 : i32
    %c0_i32_0 = arith.constant 0 : i32
    %c0_i32_1 = arith.constant 0 : i32
    return %c0_i32, %c0_i32_0 : i32, i32
  }
  func.func @transform_8(%arg0: i32) -> (i32, i32, i32) {
    %c0_i32 = arith.constant 0 : i32
    %c0_i32_0 = arith.constant 0 : i32
    %c0_i32_1 = arith.constant 0 : i32
    return %arg0, %c0_i32, %c0_i32_0 : i32, i32, i32
  }
}

</mosaic_0001>

<llo_original>
// kernel: tpu_custom_call.1
$region0: #{tpu_custom_call.1}
  #allocation0 [shape = 'u32[]', space=smem, size = 0x4, offset = 0x4, fixed_abs, tag = 'smem constant byte address 0x4 - core index']
  #allocation1 [shape = 'u32[144,128]{1,0:T(1,128)}', space=vmem, size = 0x12000, scoped, tag = 'internal scratch']
  %s0 = inlined_call_operand.hbm [shape: f32[4,8,16], index: 0, kind: input, shape index: {}]
  %s1 = inlined_call_operand.hbm [shape: f32[4,16,24], index: 1, kind: input, shape index: {}]
  %s2 = inlined_call_operand.hbm [shape: f32[16,32], index: 2, kind: input, shape index: {}]
  %s3 = inlined_call_operand.vmem [shape: f32[1,32], index: 3, kind: input, shape index: {}]
  %s4 = inlined_call_operand.hbm [shape: f32[24,64], index: 4, kind: input, shape index: {}]
  %s5 = inlined_call_operand.vmem [shape: f32[1,64], index: 5, kind: input, shape index: {}]
  %s6 = inlined_call_operand.hbm [shape: f32[32,32], index: 6, kind: input, shape index: {}]
  %s7 = inlined_call_operand.vmem [shape: f32[1,32], index: 7, kind: input, shape index: {}]
  %s8 = inlined_call_operand.hbm [shape: f32[4,8,32], index: 8, kind: output, shape index: {}]
  %s9 = sld [smem:[#allocation0]]
  $region85: #{tpu_custom_call.1} parent=0
    _
  %s11 = ssub.s32 1, %s9
  %s12 = scalar_select 0, %s11, %s9
  $region1: #{tpu_custom_call.1} parent=0
    #allocation2 [shape = 'u8[16384]{0}', space=vmem, size = 0x4000, scoped, tag = 'input window, operand 0']
    #allocation3 [shape = 's32[2]{0}', space=sflag, size = 0x8, scoped, tag = 'scoped memory for tpu_custom_call.1']
    #allocation4 [shape = 's32[2]{0}', space=sflag, size = 0x8, scoped, tag = 'scoped memory for tpu_custom_call.1']
    #allocation5 [shape = 'u8[32768]{0}', space=vmem, size = 0x8000, scoped, tag = 'input window, operand 1']
    #allocation6 [shape = 's32[2]{0}', space=sflag, size = 0x8, scoped, tag = 'scoped memory for tpu_custom_call.1']
    #allocation7 [shape = 'u8[8192]{0}', space=vmem, size = 0x2000, scoped, tag = 'input window, operand 2, single buffered']
    #allocation8 [shape = 'u8[12288]{0}', space=vmem, size = 0x3000, scoped, tag = 'input window, operand 4, single buffered']
    #allocation9 [shape = 's32[1]{0}', space=sflag, size = 0x4, scoped, tag = 'scoped memory for tpu_custom_call.1']
    #allocation10 [shape = 'u8[16384]{0}', space=vmem, size = 0x4000, scoped, tag = 'input window, operand 6, single buffered']
    #allocation11 [shape = 'u8[16384]{0}', space=vmem, size = 0x4000, scoped, tag = 'output window, operand 0']
    %13 = vsyncpa [#allocation3], 0
    %s14 = scalar_lea.sflag [#allocation3], 1
    %15 = vsyncpa %s14, 0
    %16 = vsyncpa [#allocation6], 0
    %s17 = scalar_lea.sflag [#allocation6], 1
    %18 = vsyncpa %s17, 0
    %19 = vsyncpa [#allocation9], 0
    %20 = vsyncpa [#allocation4], 0
    %s21 = scalar_lea.sflag [#allocation4], 1
    %22 = vsyncpa %s21, 0
    loop: start=0, step=1, limit=4
    $region2: #{tpu_custom_call.1} parent=1 // loop_pre_header
      _
    $region3: #{tpu_custom_call.1} parent=1 // loop_header
      %s24 = sphi 0, %s28
      %p25 = scmp.ge.s32.totalorder %s24, 4
      %s34 = sphi 0, %s36
      %s37 = sphi 0, %s34
      %s38 = sphi 0, %s37
      %s54 = sphi 0, %s38
      %s60 = sphi 0, %s62
      %s63 = sphi 0, %s60
      %s64 = sphi 0, %s63
      %s80 = sphi 0, %s64
      %s84 = sphi 0, %s84
      %s86 = sphi 0, %s84
      %s87 = sphi 0, %s86
      %s101 = sphi 0, %s87
      %s105 = sphi 0, %s105
      %s107 = sphi 0, %s105
      %s108 = sphi 0, %s107
      %s122 = sphi 0, %s108
      %s126 = sphi 0, %s126
      %s128 = sphi 0, %s126
      %s129 = sphi 0, %s128
      %s143 = sphi 0, %s129
      %s147 = sphi 0, %s147
      %s149 = sphi 0, %s147
      %s150 = sphi 0, %s149
      %s164 = sphi 0, %s150
      %s168 = sphi 0, %s168
      %s170 = sphi 0, %s168
      %s171 = sphi 0, %s170
      %s185 = sphi 0, %s171
      %s189 = sphi 0, %s189
      %s191 = sphi 0, %s189
      %s192 = sphi 0, %s191
      %s206 = sphi 0, %s192
      %s212 = sphi 0, %s214
      %s215 = sphi 0, %s212
      %s216 = sphi 0, %s215
      %s232 = sphi 0, %s216
    $region4: #{tpu_custom_call.1} parent=1 // loop_header_branch
      %27 = sbr.rel (%p25) target = $region8
    $region5: #{tpu_custom_call.1} parent=1 // loop_body
      %s29 = ssub.s32 %s24, 1
      %s30 = ssub.s32 %s24, 2
      %s31 = sadd.s32 %s24, 1
      %s32 = ssub.s32 %s24, %s31
      %p33 = scmp.eq.s32.totalorder %s32, 0
      %s35 = sadd.s32 %s34, 1
      %s36 = scalar_select %p33, %s34, %s35
      %p39 = pneg %p33
      %p40 = scmp.eq.s32.totalorder %s24, 1
      %p41 = por %p39, %p40
      %p42 = scmp.ne.s32.totalorder %s34, %s37
      %p43 = scmp.eq.s32.totalorder %s24, 0
      %p44 = por %p42, %p43
      %p45 = scmp.ne.s32.totalorder %s34, %s37
      %p46 = scmp.eq.s32.totalorder %s29, 1
      %p47 = por %p45, %p46
      %p48 = scmp.ne.s32.totalorder %s37, %s38
      %p49 = scmp.eq.s32.totalorder %s29, 0
      %p50 = por %p48, %p49
      %p51 = scmp.ne.s32.totalorder %s37, %s38
      %p52 = scmp.eq.s32.totalorder %s30, 1
      %p53 = por %p51, %p52
      %p55 = scmp.ne.s32.totalorder %s38, %s54
      %p56 = scmp.eq.s32.totalorder %s30, 0
      %p57 = por %p55, %p56
      %s58 = ssub.s32 %s24, %s31
      %p59 = scmp.eq.s32.totalorder %s58, 0
      %s61 = sadd.s32 %s60, 1
      %s62 = scalar_select %p59, %s60, %s61
      %p65 = pneg %p59
      %p66 = scmp.eq.s32.totalorder %s24, 1
      %p67 = por %p65, %p66
      %p68 = scmp.ne.s32.totalorder %s60, %s63
      %p69 = scmp.eq.s32.totalorder %s24, 0
      %p70 = por %p68, %p69
      %p71 = scmp.ne.s32.totalorder %s60, %s63
      %p72 = scmp.eq.s32.totalorder %s29, 1
      %p73 = por %p71, %p72
      %p74 = scmp.ne.s32.totalorder %s63, %s64
      %p75 = scmp.eq.s32.totalorder %s29, 0
      %p76 = por %p74, %p75
      %p77 = scmp.ne.s32.totalorder %s63, %s64
      %p78 = scmp.eq.s32.totalorder %s30, 1
      %p79 = por %p77, %p78
      %p81 = scmp.ne.s32.totalorder %s64, %s80
      %p82 = scmp.eq.s32.totalorder %s30, 0
      %p83 = por %p81, %p82
      %s85 = sadd.s32 %s84, 1
      %p88 = scmp.eq.s32.totalorder %s24, 1
      %p89 = scmp.ne.s32.totalorder %s84, %s86
      %p90 = scmp.eq.s32.totalorder %s24, 0
      %p91 = por %p89, %p90
      %p92 = scmp.ne.s32.totalorder %s84, %s86
      %p93 = scmp.eq.s32.totalorder %s29, 1
      %p94 = por %p92, %p93
      %p95 = scmp.ne.s32.totalorder %s86, %s87
      %p96 = scmp.eq.s32.totalorder %s29, 0
      %p97 = por %p95, %p96
      %p98 = scmp.ne.s32.totalorder %s86, %s87
      %p99 = scmp.eq.s32.totalorder %s30, 1
      %p100 = por %p98, %p99
      %p102 = scmp.ne.s32.totalorder %s87, %s101
      %p103 = scmp.eq.s32.totalorder %s30, 0
      %p104 = por %p102, %p103
      %s106 = sadd.s32 %s105, 1
      %p109 = scmp.eq.s32.totalorder %s24, 1
      %p110 = scmp.ne.s32.totalorder %s105, %s107
      %p111 = scmp.eq.s32.totalorder %s24, 0
      %p112 = por %p110, %p111
      %p113 = scmp.ne.s32.totalorder %s105, %s107
      %p114 = scmp.eq.s32.totalorder %s29, 1
      %p115 = por %p113, %p114
      %p116 = scmp.ne.s32.totalorder %s107, %s108
      %p117 = scmp.eq.s32.totalorder %s29, 0
      %p118 = por %p116, %p117
      %p119 = scmp.ne.s32.totalorder %s107, %s108
      %p120 = scmp.eq.s32.totalorder %s30, 1
      %p121 = por %p119, %p120
      %p123 = scmp.ne.s32.totalorder %s108, %s122
      %p124 = scmp.eq.s32.totalorder %s30, 0
      %p125 = por %p123, %p124
      %s127 = sadd.s32 %s126, 1
      %p130 = scmp.eq.s32.totalorder %s24, 1
      %p131 = scmp.ne.s32.totalorder %s126, %s128
      %p132 = scmp.eq.s32.totalorder %s24, 0
      %p133 = por %p131, %p132
      %p134 = scmp.ne.s32.totalorder %s126, %s128
      %p135 = scmp.eq.s32.totalorder %s29, 1
      %p136 = por %p134, %p135
      %p137 = scmp.ne.s32.totalorder %s128, %s129
      %p138 = scmp.eq.s32.totalorder %s29, 0
      %p139 = por %p137, %p138
      %p140 = scmp.ne.s32.totalorder %s128, %s129
      %p141 = scmp.eq.s32.totalorder %s30, 1
      %p142 = por %p140, %p141
      %p144 = scmp.ne.s32.totalorder %s129, %s143
      %p145 = scmp.eq.s32.totalorder %s30, 0
      %p146 = por %p144, %p145
      %s148 = sadd.s32 %s147, 1
      %p151 = scmp.eq.s32.totalorder %s24, 1
      %p152 = scmp.ne.s32.totalorder %s147, %s149
      %p153 = scmp.eq.s32.totalorder %s24, 0
      %p154 = por %p152, %p153
      %p155 = scmp.ne.s32.totalorder %s147, %s149
      %p156 = scmp.eq.s32.totalorder %s29, 1
      %p157 = por %p155, %p156
      %p158 = scmp.ne.s32.totalorder %s149, %s150
      %p159 = scmp.eq.s32.totalorder %s29, 0
      %p160 = por %p158, %p159
      %p161 = scmp.ne.s32.totalorder %s149, %s150
      %p162 = scmp.eq.s32.totalorder %s30, 1
      %p163 = por %p161, %p162
      %p165 = scmp.ne.s32.totalorder %s150, %s164
      %p166 = scmp.eq.s32.totalorder %s30, 0
      %p167 = por %p165, %p166
      %s169 = sadd.s32 %s168, 1
      %p172 = scmp.eq.s32.totalorder %s24, 1
      %p173 = scmp.ne.s32.totalorder %s168, %s170
      %p174 = scmp.eq.s32.totalorder %s24, 0
      %p175 = por %p173, %p174
      %p176 = scmp.ne.s32.totalorder %s168, %s170
      %p177 = scmp.eq.s32.totalorder %s29, 1
      %p178 = por %p176, %p177
      %p179 = scmp.ne.s32.totalorder %s170, %s171
      %p180 = scmp.eq.s32.totalorder %s29, 0
      %p181 = por %p179, %p180
      %p182 = scmp.ne.s32.totalorder %s170, %s171
      %p183 = scmp.eq.s32.totalorder %s30, 1
      %p184 = por %p182, %p183
      %p186 = scmp.ne.s32.totalorder %s171, %s185
      %p187 = scmp.eq.s32.totalorder %s30, 0
      %p188 = por %p186, %p187
      %s190 = sadd.s32 %s189, 1
      %p193 = scmp.eq.s32.totalorder %s24, 1
      %p194 = scmp.ne.s32.totalorder %s189, %s191
      %p195 = scmp.eq.s32.totalorder %s24, 0
      %p196 = por %p194, %p195
      %p197 = scmp.ne.s32.totalorder %s189, %s191
      %p198 = scmp.eq.s32.totalorder %s29, 1
      %p199 = por %p197, %p198
      %p200 = scmp.ne.s32.totalorder %s191, %s192
      %p201 = scmp.eq.s32.totalorder %s29, 0
      %p202 = por %p200, %p201
      %p203 = scmp.ne.s32.totalorder %s191, %s192
      %p204 = scmp.eq.s32.totalorder %s30, 1
      %p205 = por %p203, %p204
      %p207 = scmp.ne.s32.totalorder %s192, %s206
      %p208 = scmp.eq.s32.totalorder %s30, 0
      %p209 = por %p207, %p208
      %s210 = ssub.s32 %s24, %s31
      %p211 = scmp.eq.s32.totalorder %s210, 0
      %s213 = sadd.s32 %s212, 1
      %s214 = scalar_select %p211, %s212, %s213
      %p217 = pneg %p211
      %p218 = scmp.eq.s32.totalorder %s24, 1
      %p219 = por %p217, %p218
      %p220 = scmp.ne.s32.totalorder %s212, %s215
      %p221 = scmp.eq.s32.totalorder %s24, 0
      %p222 = por %p220, %p221
      %p223 = scmp.ne.s32.totalorder %s212, %s215
      %p224 = scmp.eq.s32.totalorder %s29, 1
      %p225 = por %p223, %p224
      %p226 = scmp.ne.s32.totalorder %s215, %s216
      %p227 = scmp.eq.s32.totalorder %s29, 0
      %p228 = por %p226, %p227
      %p229 = scmp.ne.s32.totalorder %s215, %s216
      %p230 = scmp.eq.s32.totalorder %s30, 1
      %p231 = por %p229, %p230
      %p233 = scmp.ne.s32.totalorder %s216, %s232
      %p234 = scmp.eq.s32.totalorder %s30, 0
      %p235 = por %p233, %p234
      %p236 = scmp.le.s32.totalorder 1, %s24
      %p237 = scmp.lt.s32.totalorder %s24, 3
      %p238 = pnand %p236, %p237
      %p239 = pneg %p238
      // Predicated region
      $region9: #{tpu_custom_call.1} parent=5 // pred_check
        _
      $region10: #{tpu_custom_call.1} parent=5 // pred_check_branch
        %241 = sbr.rel (%p238) target = $region12
      $region11: #{tpu_custom_call.1} parent=5 // pred_region
        %s242 = ssub.s32 %s24, 1
        // Predicated region
        $region13: #{tpu_custom_call.1} parent=11 // pred_check
          %p243 = pneg %p97
        $region14: #{tpu_custom_call.1} parent=11 // pred_check_branch
          %245 = sbr.rel (%p243) target = $region16
        $region15: #{tpu_custom_call.1} parent=11 // pred_region
          %s247 = ssub.s32 256, 256
          %248 = vsyncadd [#allocation6], %s247
          %s249 = sshll.u32 [#allocation7], 4
          %s250 = int_to_ptr.vmem [resolvable:$true] %s249
          %255 = dma.hbm_to_vmem [thread:$0]  %s2, 256, %s250, [#allocation6], 128, 128, 8
        $region16: #{tpu_custom_call.1} parent=11 // pred_fallthru
          _
        // Predicated region
        $region17: #{tpu_custom_call.1} parent=11 // pred_check
          %p256 = pneg %p118
        $region18: #{tpu_custom_call.1} parent=11 // pred_check_branch
          %258 = sbr.rel (%p256) target = $region20
        $region19: #{tpu_custom_call.1} parent=11 // pred_region
          _
        $region20: #{tpu_custom_call.1} parent=11 // pred_fallthru
          _
        // Predicated region
        $region21: #{tpu_custom_call.1} parent=11 // pred_check
          %p259 = pneg %p139
        $region22: #{tpu_custom_call.1} parent=11 // pred_check_branch
          %261 = sbr.rel (%p259) target = $region24
        $region23: #{tpu_custom_call.1} parent=11 // pred_region
          %s263 = ssub.s32 384, 384
          %264 = vsyncadd [#allocation9], %s263
          %s265 = sshll.u32 [#allocation8], 4
          %s266 = int_to_ptr.vmem [resolvable:$true] %s265
          %271 = dma.hbm_to_vmem [thread:$0]  %s4, 384, %s266, [#allocation9], 128, 128, 8
        $region24: #{tpu_custom_call.1} parent=11 // pred_fallthru
          _
        // Predicated region
        $region25: #{tpu_custom_call.1} parent=11 // pred_check
          %p272 = pneg %p160
        $region26: #{tpu_custom_call.1} parent=11 // pred_check_branch
          %274 = sbr.rel (%p272) target = $region28
        $region27: #{tpu_custom_call.1} parent=11 // pred_region
          _
        $region28: #{tpu_custom_call.1} parent=11 // pred_fallthru
          _
        // Predicated region
        $region29: #{tpu_custom_call.1} parent=11 // pred_check
          %p275 = pneg %p181
        $region30: #{tpu_custom_call.1} parent=11 // pred_check_branch
          %277 = sbr.rel (%p275) target = $region32
        $region31: #{tpu_custom_call.1} parent=11 // pred_region
          %s279 = ssub.s32 512, 512
          %280 = vsyncadd [#allocation9], %s279
          %s281 = sshll.u32 [#allocation10], 4
          %s282 = int_to_ptr.vmem [resolvable:$true] %s281
          %287 = dma.hbm_to_vmem [thread:$0]  %s6, 512, %s282, [#allocation9], 128, 128, 8
        $region32: #{tpu_custom_call.1} parent=11 // pred_fallthru
          _
        // Predicated region
        $region33: #{tpu_custom_call.1} parent=11 // pred_check
          %p288 = pneg %p202
        $region34: #{tpu_custom_call.1} parent=11 // pred_check_branch
          %290 = sbr.rel (%p288) target = $region36
        $region35: #{tpu_custom_call.1} parent=11 // pred_region
          _
        $region36: #{tpu_custom_call.1} parent=11 // pred_fallthru
          _
      $region12: #{tpu_custom_call.1} parent=5 // pred_fallthru
        _
      %p291 = scmp.lt.s32.totalorder %s24, 2
      // Predicated region
      $region37: #{tpu_custom_call.1} parent=5 // pred_check
        %p292 = pneg %p291
      $region38: #{tpu_custom_call.1} parent=5 // pred_check_branch
        %294 = sbr.rel (%p292) target = $region40
      $region39: #{tpu_custom_call.1} parent=5 // pred_region
        // Predicated region
        $region41: #{tpu_custom_call.1} parent=39 // pred_check
          %p295 = pneg %p44
        $region42: #{tpu_custom_call.1} parent=39 // pred_check_branch
          %297 = sbr.rel (%p295) target = $region44
        $region43: #{tpu_custom_call.1} parent=39 // pred_region
          %s298 = sand.u32 %s34, 1
          %s299 = scalar_lea.sflag [#allocation3], %s298
          %s300 = sand.u32 %s34, 1
          %s301 = smul.addr %s300, 16
          %s302 = scalar_lea.vmem [#allocation2], %s301
          %s303 = smul.u32 2, %s24
          %s305 = ssub.s32 256, 256
          %306 = vsyncadd %s299, %s305
          %s307 = smul.addr %s303, 128
          %s308 = scalar_lea.hbm %s0, %s307
          %s309 = sshll.u32 %s302, 4
          %s310 = int_to_ptr.vmem [resolvable:$true] %s309
          %315 = dma.hbm_to_vmem [thread:$0]  %s308, 256, %s310, %s299, 128, 128, 8
        $region44: #{tpu_custom_call.1} parent=39 // pred_fallthru
          _
        // Predicated region
        $region45: #{tpu_custom_call.1} parent=39 // pred_check
          %p316 = pneg %p70
        $region46: #{tpu_custom_call.1} parent=39 // pred_check_branch
          %318 = sbr.rel (%p316) target = $region48
        $region47: #{tpu_custom_call.1} parent=39 // pred_region
          %s319 = sand.u32 %s24, 1
          %s320 = scalar_lea.sflag [#allocation6], %s319
          %s321 = sand.u32 %s60, 1
          %s322 = smul.addr %s321, 32
          %s323 = scalar_lea.vmem [#allocation5], %s322
          %s324 = smul.u32 2, %s24
          %s326 = ssub.s32 512, 512
          %327 = vsyncadd %s320, %s326
          %s328 = smul.addr %s324, 2
          %s329 = smul.addr %s328, 128
          %s330 = scalar_lea.hbm %s1, %s329
          %s331 = sshll.u32 %s323, 4
          %s332 = int_to_ptr.vmem [resolvable:$true] %s331
          %337 = dma.hbm_to_vmem [thread:$0]  %s330, 512, %s332, %s320, 128, 128, 8
        $region48: #{tpu_custom_call.1} parent=39 // pred_fallthru
          _
      $region40: #{tpu_custom_call.1} parent=5 // pred_fallthru
        _
      %p338 = scmp.le.s32.totalorder 1, %s24
      %p339 = scmp.lt.s32.totalorder %s24, 3
      %p340 = pnand %p338, %p339
      %p341 = pneg %p340
      // Predicated region
      $region49: #{tpu_custom_call.1} parent=5 // pred_check
        _
      $region50: #{tpu_custom_call.1} parent=5 // pred_check_branch
        %343 = sbr.rel (%p340) target = $region52
      $region51: #{tpu_custom_call.1} parent=5 // pred_region
        %s344 = ssub.s32 %s24, 1
        %s345 = sand.u32 %s37, 1
        %s346 = scalar_lea.sflag [#allocation3], %s345
        %s347 = sand.u32 %s37, 1
        %s348 = smul.addr %s347, 16
        %s349 = scalar_lea.vmem [#allocation2], %s348
        // Predicated region
        $region53: #{tpu_custom_call.1} parent=51 // pred_check
          %p350 = pneg %p50
        $region54: #{tpu_custom_call.1} parent=51 // pred_check_branch
          %352 = sbr.rel (%p350) target = $region56
        $region55: #{tpu_custom_call.1} parent=51 // pred_region
          %353 = dma.done %s346, 256
        $region56: #{tpu_custom_call.1} parent=51 // pred_fallthru
          _
        %s354 = sand.u32 %s29, 1
        %s355 = scalar_lea.sflag [#allocation6], %s354
        %s356 = sand.u32 %s63, 1
        %s357 = smul.addr %s356, 32
        %s358 = scalar_lea.vmem [#allocation5], %s357
        // Predicated region
        $region57: #{tpu_custom_call.1} parent=51 // pred_check
          %p359 = pneg %p76
        $region58: #{tpu_custom_call.1} parent=51 // pred_check_branch
          %361 = sbr.rel (%p359) target = $region60
        $region59: #{tpu_custom_call.1} parent=51 // pred_region
          %362 = dma.done %s355, 512
        $region60: #{tpu_custom_call.1} parent=51 // pred_fallthru
          _
        // Predicated region
        $region61: #{tpu_custom_call.1} parent=51 // pred_check
          %p363 = pneg %p97
        $region62: #{tpu_custom_call.1} parent=51 // pred_check_branch
          %365 = sbr.rel (%p363) target = $region64
        $region63: #{tpu_custom_call.1} parent=51 // pred_region
          %366 = dma.done [#allocation6], 256
        $region64: #{tpu_custom_call.1} parent=51 // pred_fallthru
          _
        // Predicated region
        $region65: #{tpu_custom_call.1} parent=51 // pred_check
          %p367 = pneg %p139
        $region66: #{tpu_custom_call.1} parent=51 // pred_check_branch
          %369 = sbr.rel (%p367) target = $region68
        $region67: #{tpu_custom_call.1} parent=51 // pred_region
          %370 = dma.done [#allocation9], 384
        $region68: #{tpu_custom_call.1} parent=51 // pred_fallthru
          _
        // Predicated region
        $region69: #{tpu_custom_call.1} parent=51 // pred_check
          %p371 = pneg %p181
        $region70: #{tpu_custom_call.1} parent=51 // pred_check_branch
          %373 = sbr.rel (%p371) target = $region72
        $region71: #{tpu_custom_call.1} parent=51 // pred_region
          %374 = dma.done [#allocation9], 512
        $region72: #{tpu_custom_call.1} parent=51 // pred_fallthru
          _
        %s375 = sand.u32 %s37, 1
        %s376 = scalar_lea.sflag [#allocation3], %s375
        %s377 = sand.u32 %s37, 1
        %s378 = smul.addr %s377, 16
        %s379 = scalar_lea.vmem [#allocation2], %s378
        %p380 = pneg %p50
        %p381 = pneg %p47
        %s382 = sand.u32 %s29, 1
        %s383 = scalar_lea.sflag [#allocation6], %s382
        %s384 = sand.u32 %s63, 1
        %s385 = smul.addr %s384, 32
        %s386 = scalar_lea.vmem [#allocation5], %s385
        %p387 = pneg %p76
        %p388 = pneg %p73
        %p389 = pneg %p97
        %p390 = pneg %p94
        %p391 = pneg %p118
        %p392 = pneg %p115
        %p393 = pneg %p139
        %p394 = pneg %p136
        %p395 = pneg %p160
        %p396 = pneg %p157
        %p397 = pneg %p181
        %p398 = pneg %p178
        %p399 = pneg %p202
        %p400 = pneg %p199
        %p401 = pneg %p228
        %p402 = pneg %p225
        %s403 = sand.u32 %s215, 1
        %s404 = scalar_lea.sflag [#allocation4], %s403
        %s405 = sand.u32 %s215, 1
        %s406 = smul.addr %s405, 16
        %s407 = scalar_lea.vmem [#allocation11], %s406
        %s408 = smul.u32 2, %s29
        %s409 = smul.u32 2, %s29
        %s410 = smul.u32 2, %s29
        %v411 = vld [vmem:[%s349] sm:$0xff]
        %v412 = vld [vmem:[%s349 + $0x8] sm:$0xff]
        %v413 = vld [vmem:[%s358] sm:$0xff]
        %v414 = vld [vmem:[%s358 + $0x8] sm:$0xff]
        %v415 = vld [vmem:[%s358 + $0x10] sm:$0xff]
        %v416 = vld [vmem:[%s358 + $0x18] sm:$0xff]
        %v417 = vld [vmem:[%s3] sm:$0x1]
        %v418 = vld [vmem:[%s5] sm:$0x1]
        %v419 = vld [vmem:[%s7] sm:$0x1]
        %v420 = vld [vmem:[#allocation7] sm:$0xff]
        %v421 = vld [vmem:[#allocation7 + $0x8] sm:$0xff]
        %v423 = vlaneseq
        %v424 = vshrl.u32 %v423, 7
        %v425 = vsub.s32 0, %v424
        %v426 = vrot.slane %v417, %v425
        %vm428 = vcmask 130048
        %v430 = vsel %vm428, %v411, 0
        %v433 = vsel %vm428, %v412, 0
        %435 = vmatprep.subr.mxu0 0.0
        %436 = vmatpush1.msra.mxu0 0.0
        %437 = vmatprep.subr.mxu0 0.0
        %438 = vmatpush1.msra.mxu0 0.0
        %439 = vmatprep.subr.mxu0 0.0
        %440 = vmatpush1.msra.mxu0 0.0
        %441 = vmatprep.subr.mxu0 0.0
        %442 = vmatpush1.msra.mxu0 0.0
        %443 = vmatprep.subr.mxu0 0.0
        %444 = vmatpush1.msra.mxu0 0.0
        %445 = vmatprep.subr.mxu0 0.0
        %446 = vmatpush1.msra.mxu0 0.0
        %447 = vmatprep.subr.mxu0 0.0
        %448 = vmatpush1.msra.mxu0 0.0
        %449 = vmatprep.subr.mxu0 0.0
        %450 = vmatpush1.msra.mxu0 0.0
        %451 = vmatprep.subr.mxu0 0.0
        %452 = vmatpush1.msra.mxu0 0.0
        %453 = vmatprep.subr.mxu0 0.0
        %454 = vmatpush1.msra.mxu0 0.0
        %455 = vmatprep.subr.mxu0 0.0
        %456 = vmatpush1.msra.mxu0 0.0
        %457 = vmatprep.subr.mxu0 0.0
        %458 = vmatpush1.msra.mxu0 0.0
        %459 = vmatprep.subr.mxu0 0.0
        %460 = vmatpush1.msra.mxu0 0.0
        %461 = vmatprep.subr.mxu0 0.0
        %462 = vmatpush1.msra.mxu0 0.0
        %463 = vmatprep.subr.mxu0 0.0
        %464 = vmatpush1.msra.mxu0 %v421
        %465 = vmatprep.subr.mxu0 0.0
        %466 = vmatpush1.msra.mxu0 %v420
        %467 = vmatprep.subr.mxu0 0.0
        %468 = vmatpush2.msra.mxu0 0.0
        %469 = vmatprep.subr.mxu0 0.0
        %470 = vmatpush2.msra.mxu0 0.0
        %471 = vmatprep.subr.mxu0 0.0
        %472 = vmatpush2.msra.mxu0 0.0
        %473 = vmatprep.subr.mxu0 0.0
        %474 = vmatpush2.msra.mxu0 0.0
        %475 = vmatprep.subr.mxu0 0.0
        %476 = vmatpush2.msra.mxu0 0.0
        %477 = vmatprep.subr.mxu0 0.0
        %478 = vmatpush2.msra.mxu0 0.0
        %479 = vmatprep.subr.mxu0 0.0
        %480 = vmatpush2.msra.mxu0 0.0
        %481 = vmatprep.subr.mxu0 0.0
        %482 = vmatpush2.msra.mxu0 0.0
        %483 = vmatprep.subr.mxu0 0.0
        %484 = vmatpush2.msra.mxu0 0.0
        %485 = vmatprep.subr.mxu0 0.0
        %486 = vmatpush2.msra.mxu0 0.0
        %487 = vmatprep.subr.mxu0 0.0
        %488 = vmatpush2.msra.mxu0 0.0
        %489 = vmatprep.subr.mxu0 0.0
        %490 = vmatpush2.msra.mxu0 0.0
        %491 = vmatprep.subr.mxu0 0.0
        %492 = vmatpush2.msra.mxu0 0.0
        %493 = vmatprep.subr.mxu0 0.0
        %494 = vmatpush2.msra.mxu0 0.0
        %495 = vmatprep.subr.mxu0 0.0
        %496 = vmatpush2.msra.mxu0 0.0
        %497 = vmatprep.subr.mxu0 0.0
        %498 = vmatpush2.msra.mxu0 0.0
        %499 = vmatprep.mubr.f32.mxu0 0.0
        %500 = vmatmul.mubr.f32.gmra.mxu0 %v430
        %v501 = vpop.f32.mrf.mxu0
        %v502 = vadd.f32 %v426, %v501
        %v503 = vpop.f32.mrf.mxu0
        %504 = vmatprep.mubr.f32.mxu0 0.0
        %505 = vmatmul.mubr.f32.gmra.mxu0 %v433
        %v506 = vpop.f32.mrf.mxu0
        %v507 = vadd.f32 %v426, %v506
        %v508 = vpop.f32.mrf.mxu0
        %509 = vdwg.mxu0
        %v510 = vld [vmem:[#allocation8] sm:$0xff]
        %v511 = vld [vmem:[#allocation8 + $0x8] sm:$0xff]
        %v512 = vld [vmem:[#allocation8 + $0x10] sm:$0xff]
        %v514 = vlaneseq
        %v515 = vshrl.u32 %v514, 7
        %v516 = vsub.s32 0, %v515
        %v517 = vrot.slane %v418, %v516
        %vm519 = vcmask 195584
        %v521 = vsel %vm519, %v413, 0
        %v524 = vsel %vm519, %v414, 0
        %v527 = vsel %vm519, %v415, 0
        %v530 = vsel %vm519, %v416, 0
        %532 = vmatprep.subr.mxu0 0.0
        %533 = vmatpush1.msra.mxu0 0.0
        %534 = vmatprep.subr.mxu0 0.0
        %535 = vmatpush1.msra.mxu0 0.0
        %536 = vmatprep.subr.mxu0 0.0
        %537 = vmatpush1.msra.mxu0 0.0
        %538 = vmatprep.subr.mxu0 0.0
        %539 = vmatpush1.msra.mxu0 0.0
        %540 = vmatprep.subr.mxu0 0.0
        %541 = vmatpush1.msra.mxu0 0.0
        %542 = vmatprep.subr.mxu0 0.0
        %543 = vmatpush1.msra.mxu0 0.0
        %544 = vmatprep.subr.mxu0 0.0
        %545 = vmatpush1.msra.mxu0 0.0
        %546 = vmatprep.subr.mxu0 0.0
        %547 = vmatpush1.msra.mxu0 0.0
        %548 = vmatprep.subr.mxu0 0.0
        %549 = vmatpush1.msra.mxu0 0.0
        %550 = vmatprep.subr.mxu0 0.0
        %551 = vmatpush1.msra.mxu0 0.0
        %552 = vmatprep.subr.mxu0 0.0
        %553 = vmatpush1.msra.mxu0 0.0
        %554 = vmatprep.subr.mxu0 0.0
        %555 = vmatpush1.msra.mxu0 0.0
        %556 = vmatprep.subr.mxu0 0.0
        %557 = vmatpush1.msra.mxu0 0.0
        %558 = vmatprep.subr.mxu0 0.0
        %559 = vmatpush1.msra.mxu0 %v512
        %560 = vmatprep.subr.mxu0 0.0
        %561 = vmatpush1.msra.mxu0 %v511
        %562 = vmatprep.subr.mxu0 0.0
        %563 = vmatpush1.msra.mxu0 %v510
        %564 = vmatprep.subr.mxu0 0.0
        %565 = vmatpush2.msra.mxu0 0.0
        %566 = vmatprep.subr.mxu0 0.0
        %567 = vmatpush2.msra.mxu0 0.0
        %568 = vmatprep.subr.mxu0 0.0
        %569 = vmatpush2.msra.mxu0 0.0
        %570 = vmatprep.subr.mxu0 0.0
        %571 = vmatpush2.msra.mxu0 0.0
        %572 = vmatprep.subr.mxu0 0.0
        %573 = vmatpush2.msra.mxu0 0.0
        %574 = vmatprep.subr.mxu0 0.0
        %575 = vmatpush2.msra.mxu0 0.0
        %576 = vmatprep.subr.mxu0 0.0
        %577 = vmatpush2.msra.mxu0 0.0
        %578 = vmatprep.subr.mxu0 0.0
        %579 = vmatpush2.msra.mxu0 0.0
        %580 = vmatprep.subr.mxu0 0.0
        %581 = vmatpush2.msra.mxu0 0.0
        %582 = vmatprep.subr.mxu0 0.0
        %583 = vmatpush2.msra.mxu0 0.0
        %584 = vmatprep.subr.mxu0 0.0
        %585 = vmatpush2.msra.mxu0 0.0
        %586 = vmatprep.subr.mxu0 0.0
        %587 = vmatpush2.msra.mxu0 0.0
        %588 = vmatprep.subr.mxu0 0.0
        %589 = vmatpush2.msra.mxu0 0.0
        %590 = vmatprep.subr.mxu0 0.0
        %591 = vmatpush2.msra.mxu0 0.0
        %592 = vmatprep.subr.mxu0 0.0
        %593 = vmatpush2.msra.mxu0 0.0
        %594 = vmatprep.subr.mxu0 0.0
        %595 = vmatpush2.msra.mxu0 0.0
        %596 = vmatprep.mubr.f32.mxu0 0.0
        %597 = vmatmul.mubr.f32.gmra.mxu0 %v521
        %v598 = vpop.f32.mrf.mxu0
        %v599 = vadd.f32 %v517, %v598
        %v600 = vpop.f32.mrf.mxu0
        %601 = vmatprep.mubr.f32.mxu0 0.0
        %602 = vmatmul.mubr.f32.gmra.mxu0 %v524
        %v603 = vpop.f32.mrf.mxu0
        %v604 = vadd.f32 %v517, %v603
        %v605 = vpop.f32.mrf.mxu0
        %606 = vmatprep.mubr.f32.mxu0 0.0
        %607 = vmatmul.mubr.f32.gmra.mxu0 %v527
        %v608 = vpop.f32.mrf.mxu0
        %v609 = vadd.f32 %v517, %v608
        %v610 = vpop.f32.mrf.mxu0
        %611 = vmatprep.mubr.f32.mxu0 0.0
        %612 = vmatmul.mubr.f32.gmra.mxu0 %v530
        %v613 = vpop.f32.mrf.mxu0
        %v614 = vadd.f32 %v517, %v613
        %v615 = vpop.f32.mrf.mxu0
        %616 = vdwg.mxu0
        %vm617 = vcmask 64512
        %v619 = vsel %vm617, %v502, 0
        %v622 = vsel %vm617, %v599, 0
        %v625 = vsel %vm617, %v604, 0
        %627 = vmatprep.subr.mxu0 0.0
        %628 = vmatpush1.xpose.msra.mxu0 0.0
        %629 = vmatprep.subr.mxu0 0.0
        %630 = vmatpush1.xpose.msra.mxu0 0.0
        %631 = vmatprep.subr.mxu0 0.0
        %632 = vmatpush1.xpose.msra.mxu0 0.0
        %633 = vmatprep.subr.mxu0 0.0
        %634 = vmatpush1.xpose.msra.mxu0 0.0
        %635 = vmatprep.subr.mxu0 0.0
        %636 = vmatpush1.xpose.msra.mxu0 0.0
        %637 = vmatprep.subr.mxu0 0.0
        %638 = vmatpush1.xpose.msra.mxu0 0.0
        %639 = vmatprep.subr.mxu0 0.0
        %640 = vmatpush1.xpose.msra.mxu0 0.0
        %641 = vmatprep.subr.mxu0 0.0
        %642 = vmatpush1.xpose.msra.mxu0 0.0
        %643 = vmatprep.subr.mxu0 0.0
        %644 = vmatpush1.xpose.msra.mxu0 0.0
        %645 = vmatprep.subr.mxu0 0.0
        %646 = vmatpush1.xpose.msra.mxu0 0.0
        %647 = vmatprep.subr.mxu0 0.0
        %648 = vmatpush1.xpose.msra.mxu0 0.0
        %649 = vmatprep.subr.mxu0 0.0
        %650 = vmatpush1.xpose.msra.mxu0 0.0
        %651 = vmatprep.subr.mxu0 0.0
        %652 = vmatpush1.xpose.msra.mxu0 0.0
        %653 = vmatprep.subr.mxu0 0.0
        %654 = vmatpush1.xpose.msra.mxu0 0.0
        %655 = vmatprep.subr.mxu0 0.0
        %656 = vmatpush1.xpose.msra.mxu0 %v625
        %657 = vmatprep.subr.mxu0 0.0
        %658 = vmatpush1.xpose.msra.mxu0 %v622
        %659 = vmatprep.subr.mxu0 0.0
        %660 = vmatpush2.xpose.msra.mxu0 0.0
        %661 = vmatprep.subr.mxu0 0.0
        %662 = vmatpush2.xpose.msra.mxu0 0.0
        %663 = vmatprep.subr.mxu0 0.0
        %664 = vmatpush2.xpose.msra.mxu0 0.0
        %665 = vmatprep.subr.mxu0 0.0
        %666 = vmatpush2.xpose.msra.mxu0 0.0
        %667 = vmatprep.subr.mxu0 0.0
        %668 = vmatpush2.xpose.msra.mxu0 0.0
        %669 = vmatprep.subr.mxu0 0.0
        %670 = vmatpush2.xpose.msra.mxu0 0.0
        %671 = vmatprep.subr.mxu0 0.0
        %672 = vmatpush2.xpose.msra.mxu0 0.0
        %673 = vmatprep.subr.mxu0 0.0
        %674 = vmatpush2.xpose.msra.mxu0 0.0
        %675 = vmatprep.subr.mxu0 0.0
        %676 = vmatpush2.xpose.msra.mxu0 0.0
        %677 = vmatprep.subr.mxu0 0.0
        %678 = vmatpush2.xpose.msra.mxu0 0.0
        %679 = vmatprep.subr.mxu0 0.0
        %680 = vmatpush2.xpose.msra.mxu0 0.0
        %681 = vmatprep.subr.mxu0 0.0
        %682 = vmatpush2.xpose.msra.mxu0 0.0
        %683 = vmatprep.subr.mxu0 0.0
        %684 = vmatpush2.xpose.msra.mxu0 0.0
        %685 = vmatprep.subr.mxu0 0.0
        %686 = vmatpush2.xpose.msra.mxu0 0.0
        %687 = vmatprep.subr.mxu0 0.0
        %688 = vmatpush2.xpose.msra.mxu0 0.0
        %689 = vmatprep.subr.mxu0 0.0
        %690 = vmatpush2.xpose.msra.mxu0 0.0
        %691 = vmatprep.mubr.f32.mxu0 0.0
        %692 = vmatmul.mubr.f32.gmra.mxu0 %v619
        %v693 = vpop.f32.mrf.mxu0
        %v694 = vadd.f32 0.0, %v693
        %v695 = vpop.f32.mrf.mxu0
        %696 = vdwg.mxu0
        %v698 = vsel %vm617, %v507, 0
        %v701 = vsel %vm617, %v609, 0
        %v704 = vsel %vm617, %v614, 0
        %706 = vmatprep.subr.mxu0 0.0
        %707 = vmatpush1.xpose.msra.mxu0 0.0
        %708 = vmatprep.subr.mxu0 0.0
        %709 = vmatpush1.xpose.msra.mxu0 0.0
        %710 = vmatprep.subr.mxu0 0.0
        %711 = vmatpush1.xpose.msra.mxu0 0.0
        %712 = vmatprep.subr.mxu0 0.0
        %713 = vmatpush1.xpose.msra.mxu0 0.0
        %714 = vmatprep.subr.mxu0 0.0
        %715 = vmatpush1.xpose.msra.mxu0 0.0
        %716 = vmatprep.subr.mxu0 0.0
        %717 = vmatpush1.xpose.msra.mxu0 0.0
        %718 = vmatprep.subr.mxu0 0.0
        %719 = vmatpush1.xpose.msra.mxu0 0.0
        %720 = vmatprep.subr.mxu0 0.0
        %721 = vmatpush1.xpose.msra.mxu0 0.0
        %722 = vmatprep.subr.mxu0 0.0
        %723 = vmatpush1.xpose.msra.mxu0 0.0
        %724 = vmatprep.subr.mxu0 0.0
        %725 = vmatpush1.xpose.msra.mxu0 0.0
        %726 = vmatprep.subr.mxu0 0.0
        %727 = vmatpush1.xpose.msra.mxu0 0.0
        %728 = vmatprep.subr.mxu0 0.0
        %729 = vmatpush1.xpose.msra.mxu0 0.0
        %730 = vmatprep.subr.mxu0 0.0
        %731 = vmatpush1.xpose.msra.mxu0 0.0
        %732 = vmatprep.subr.mxu0 0.0
        %733 = vmatpush1.xpose.msra.mxu0 0.0
        %734 = vmatprep.subr.mxu0 0.0
        %735 = vmatpush1.xpose.msra.mxu0 %v704
        %736 = vmatprep.subr.mxu0 0.0
        %737 = vmatpush1.xpose.msra.mxu0 %v701
        %738 = vmatprep.subr.mxu0 0.0
        %739 = vmatpush2.xpose.msra.mxu0 0.0
        %740 = vmatprep.subr.mxu0 0.0
        %741 = vmatpush2.xpose.msra.mxu0 0.0
        %742 = vmatprep.subr.mxu0 0.0
        %743 = vmatpush2.xpose.msra.mxu0 0.0
        %744 = vmatprep.subr.mxu0 0.0
        %745 = vmatpush2.xpose.msra.mxu0 0.0
        %746 = vmatprep.subr.mxu0 0.0
        %747 = vmatpush2.xpose.msra.mxu0 0.0
        %748 = vmatprep.subr.mxu0 0.0
        %749 = vmatpush2.xpose.msra.mxu0 0.0
        %750 = vmatprep.subr.mxu0 0.0
        %751 = vmatpush2.xpose.msra.mxu0 0.0
        %752 = vmatprep.subr.mxu0 0.0
        %753 = vmatpush2.xpose.msra.mxu0 0.0
        %754 = vmatprep.subr.mxu0 0.0
        %755 = vmatpush2.xpose.msra.mxu0 0.0
        %756 = vmatprep.subr.mxu0 0.0
        %757 = vmatpush2.xpose.msra.mxu0 0.0
        %758 = vmatprep.subr.mxu0 0.0
        %759 = vmatpush2.xpose.msra.mxu0 0.0
        %760 = vmatprep.subr.mxu0 0.0
        %761 = vmatpush2.xpose.msra.mxu0 0.0
        %762 = vmatprep.subr.mxu0 0.0
        %763 = vmatpush2.xpose.msra.mxu0 0.0
        %764 = vmatprep.subr.mxu0 0.0
        %765 = vmatpush2.xpose.msra.mxu0 0.0
        %766 = vmatprep.subr.mxu0 0.0
        %767 = vmatpush2.xpose.msra.mxu0 0.0
        %768 = vmatprep.subr.mxu0 0.0
        %769 = vmatpush2.xpose.msra.mxu0 0.0
        %770 = vmatprep.mubr.f32.mxu0 0.0
        %771 = vmatmul.mubr.f32.gmra.mxu0 %v698
        %v772 = vpop.f32.mrf.mxu0
        %v773 = vadd.f32 0.0, %v772
        %v774 = vpop.f32.mrf.mxu0
        %775 = vdwg.mxu0
        %v776 = vmul.f32 %v694, 0.17677669
        %v777 = vmul.f32 %v773, 0.17677669
        %v778 = vsel %vm428, %v776, -inf
        %779 = vmax.xlane.f32.xlu0 %v778
        %v780 = vpop.xlane.xlu0 %779
        %v781 = vsel %vm428, %v777, -inf
        %782 = vmax.xlane.f32.xlu0 %v781
        %v783 = vpop.xlane.xlu0 %782
        %v784 = vsub.f32 %v776, %v780
        %v785 = vsub.f32 %v777, %v783
        %v786 = vmul.f32 %v784, 1.442695
        %v787 = vpow.pop %v786
        %v788 = vmul.f32 %v785, 1.442695
        %v789 = vpow.pop %v788
        %v790 = vsel %vm428, %v787, 0.0
        %791 = vadd.xlane.f32.xlu0 %v790
        %v792 = vpop.xlane.xlu0 %791
        %v793 = vsel %vm428, %v789, 0.0
        %794 = vadd.xlane.f32.xlu0 %v793
        %v795 = vpop.xlane.xlu0 %794
        %v796 = vrcp.pop %v792
        %v797 = vrcp.pop %v795
        %v798 = vmul.f32 %v787, %v796
        %v799 = vmul.f32 %v789, %v797
        %800 = vrot.lane.b32.xlu0 %v599, 96
        %v801 = vpop.permute.xlu0 %800
        %802 = vrot.lane.b32.xlu0 %v604, 96
        %v803 = vpop.permute.xlu0 %802
        %v807 = vsel %vm428, %v798, 0
        %809 = vmatprep.subr.mxu0 0.0
        %810 = vmatpush1.msra.mxu0 0.0
        %811 = vmatprep.subr.mxu0 0.0
        %812 = vmatpush1.msra.mxu0 0.0
        %813 = vmatprep.subr.mxu0 0.0
        %814 = vmatpush1.msra.mxu0 0.0
        %815 = vmatprep.subr.mxu0 0.0
        %816 = vmatpush1.msra.mxu0 0.0
        %817 = vmatprep.subr.mxu0 0.0
        %818 = vmatpush1.msra.mxu0 0.0
        %819 = vmatprep.subr.mxu0 0.0
        %820 = vmatpush1.msra.mxu0 0.0
        %821 = vmatprep.subr.mxu0 0.0
        %822 = vmatpush1.msra.mxu0 0.0
        %823 = vmatprep.subr.mxu0 0.0
        %824 = vmatpush1.msra.mxu0 0.0
        %825 = vmatprep.subr.mxu0 0.0
        %826 = vmatpush1.msra.mxu0 0.0
        %827 = vmatprep.subr.mxu0 0.0
        %828 = vmatpush1.msra.mxu0 0.0
        %829 = vmatprep.subr.mxu0 0.0
        %830 = vmatpush1.msra.mxu0 0.0
        %831 = vmatprep.subr.mxu0 0.0
        %832 = vmatpush1.msra.mxu0 0.0
        %833 = vmatprep.subr.mxu0 0.0
        %834 = vmatpush1.msra.mxu0 0.0
        %835 = vmatprep.subr.mxu0 0.0
        %836 = vmatpush1.msra.mxu0 0.0
        %837 = vmatprep.subr.mxu0 0.0
        %838 = vmatpush1.msra.mxu0 %v803
        %839 = vmatprep.subr.mxu0 0.0
        %840 = vmatpush1.msra.mxu0 %v801
        %841 = vmatprep.subr.mxu0 0.0
        %842 = vmatpush2.msra.mxu0 0.0
        %843 = vmatprep.subr.mxu0 0.0
        %844 = vmatpush2.msra.mxu0 0.0
        %845 = vmatprep.subr.mxu0 0.0
        %846 = vmatpush2.msra.mxu0 0.0
        %847 = vmatprep.subr.mxu0 0.0
        %848 = vmatpush2.msra.mxu0 0.0
        %849 = vmatprep.subr.mxu0 0.0
        %850 = vmatpush2.msra.mxu0 0.0
        %851 = vmatprep.subr.mxu0 0.0
        %852 = vmatpush2.msra.mxu0 0.0
        %853 = vmatprep.subr.mxu0 0.0
        %854 = vmatpush2.msra.mxu0 0.0
        %855 = vmatprep.subr.mxu0 0.0
        %856 = vmatpush2.msra.mxu0 0.0
        %857 = vmatprep.subr.mxu0 0.0
        %858 = vmatpush2.msra.mxu0 0.0
        %859 = vmatprep.subr.mxu0 0.0
        %860 = vmatpush2.msra.mxu0 0.0
        %861 = vmatprep.subr.mxu0 0.0
        %862 = vmatpush2.msra.mxu0 0.0
        %863 = vmatprep.subr.mxu0 0.0
        %864 = vmatpush2.msra.mxu0 0.0
        %865 = vmatprep.subr.mxu0 0.0
        %866 = vmatpush2.msra.mxu0 0.0
        %867 = vmatprep.subr.mxu0 0.0
        %868 = vmatpush2.msra.mxu0 0.0
        %869 = vmatprep.subr.mxu0 0.0
        %870 = vmatpush2.msra.mxu0 0.0
        %871 = vmatprep.subr.mxu0 0.0
        %872 = vmatpush2.msra.mxu0 0.0
        %873 = vmatprep.mubr.f32.mxu0 0.0
        %874 = vmatmul.mubr.f32.gmra.mxu0 %v807
        %v875 = vpop.f32.mrf.mxu0
        %v876 = vadd.f32 0.0, %v875
        %v877 = vpop.f32.mrf.mxu0
        %878 = vdwg.mxu0
        %879 = vrot.lane.b32.xlu0 %v609, 96
        %v880 = vpop.permute.xlu0 %879
        %881 = vrot.lane.b32.xlu0 %v614, 96
        %v882 = vpop.permute.xlu0 %881
        %v886 = vsel %vm428, %v799, 0
        %888 = vmatprep.subr.mxu0 0.0
        %889 = vmatpush1.msra.mxu0 0.0
        %890 = vmatprep.subr.mxu0 0.0
        %891 = vmatpush1.msra.mxu0 0.0
        %892 = vmatprep.subr.mxu0 0.0
        %893 = vmatpush1.msra.mxu0 0.0
        %894 = vmatprep.subr.mxu0 0.0
        %895 = vmatpush1.msra.mxu0 0.0
        %896 = vmatprep.subr.mxu0 0.0
        %897 = vmatpush1.msra.mxu0 0.0
        %898 = vmatprep.subr.mxu0 0.0
        %899 = vmatpush1.msra.mxu0 0.0
        %900 = vmatprep.subr.mxu0 0.0
        %901 = vmatpush1.msra.mxu0 0.0
        %902 = vmatprep.subr.mxu0 0.0
        %903 = vmatpush1.msra.mxu0 0.0
        %904 = vmatprep.subr.mxu0 0.0
        %905 = vmatpush1.msra.mxu0 0.0
        %906 = vmatprep.subr.mxu0 0.0
        %907 = vmatpush1.msra.mxu0 0.0
        %908 = vmatprep.subr.mxu0 0.0
        %909 = vmatpush1.msra.mxu0 0.0
        %910 = vmatprep.subr.mxu0 0.0
        %911 = vmatpush1.msra.mxu0 0.0
        %912 = vmatprep.subr.mxu0 0.0
        %913 = vmatpush1.msra.mxu0 0.0
        %914 = vmatprep.subr.mxu0 0.0
        %915 = vmatpush1.msra.mxu0 0.0
        %916 = vmatprep.subr.mxu0 0.0
        %917 = vmatpush1.msra.mxu0 %v882
        %918 = vmatprep.subr.mxu0 0.0
        %919 = vmatpush1.msra.mxu0 %v880
        %920 = vmatprep.subr.mxu0 0.0
        %921 = vmatpush2.msra.mxu0 0.0
        %922 = vmatprep.subr.mxu0 0.0
        %923 = vmatpush2.msra.mxu0 0.0
        %924 = vmatprep.subr.mxu0 0.0
        %925 = vmatpush2.msra.mxu0 0.0
        %926 = vmatprep.subr.mxu0 0.0
        %927 = vmatpush2.msra.mxu0 0.0
        %928 = vmatprep.subr.mxu0 0.0
        %929 = vmatpush2.msra.mxu0 0.0
        %930 = vmatprep.subr.mxu0 0.0
        %931 = vmatpush2.msra.mxu0 0.0
        %932 = vmatprep.subr.mxu0 0.0
        %933 = vmatpush2.msra.mxu0 0.0
        %934 = vmatprep.subr.mxu0 0.0
        %935 = vmatpush2.msra.mxu0 0.0
        %936 = vmatprep.subr.mxu0 0.0
        %937 = vmatpush2.msra.mxu0 0.0
        %938 = vmatprep.subr.mxu0 0.0
        %939 = vmatpush2.msra.mxu0 0.0
        %940 = vmatprep.subr.mxu0 0.0
        %941 = vmatpush2.msra.mxu0 0.0
        %942 = vmatprep.subr.mxu0 0.0
        %943 = vmatpush2.msra.mxu0 0.0
        %944 = vmatprep.subr.mxu0 0.0
        %945 = vmatpush2.msra.mxu0 0.0
        %946 = vmatprep.subr.mxu0 0.0
        %947 = vmatpush2.msra.mxu0 0.0
        %948 = vmatprep.subr.mxu0 0.0
        %949 = vmatpush2.msra.mxu0 0.0
        %950 = vmatprep.subr.mxu0 0.0
        %951 = vmatpush2.msra.mxu0 0.0
        %952 = vmatprep.mubr.f32.mxu0 0.0
        %953 = vmatmul.mubr.f32.gmra.mxu0 %v886
        %v954 = vpop.f32.mrf.mxu0
        %v955 = vadd.f32 0.0, %v954
        %v956 = vpop.f32.mrf.mxu0
        %957 = vdwg.mxu0
        %v958 = vadd.f32 %v502, %v876
        %v959 = vadd.f32 %v507, %v955
        %960 = vrot.lane.b32.xlu0 %v502, 120
        %v961 = vpop.permute.xlu0 %960
        %962 = vrot.lane.b32.xlu0 %v599, 120
        %v963 = vpop.permute.xlu0 %962
        %964 = vrot.lane.b32.xlu0 %v604, 120
        %v965 = vpop.permute.xlu0 %964
        %v966 = vsel %vm617, %v961, 0
        %v968 = vsel %vm617, %v963, 0
        %v970 = vsel %vm617, %v965, 0
        %972 = vmatprep.subr.mxu0 0.0
        %973 = vmatpush1.xpose.msra.mxu0 0.0
        %974 = vmatprep.subr.mxu0 0.0
        %975 = vmatpush1.xpose.msra.mxu0 0.0
        %976 = vmatprep.subr.mxu0 0.0
        %977 = vmatpush1.xpose.msra.mxu0 0.0
        %978 = vmatprep.subr.mxu0 0.0
        %979 = vmatpush1.xpose.msra.mxu0 0.0
        %980 = vmatprep.subr.mxu0 0.0
        %981 = vmatpush1.xpose.msra.mxu0 0.0
        %982 = vmatprep.subr.mxu0 0.0
        %983 = vmatpush1.xpose.msra.mxu0 0.0
        %984 = vmatprep.subr.mxu0 0.0
        %985 = vmatpush1.xpose.msra.mxu0 0.0
        %986 = vmatprep.subr.mxu0 0.0
        %987 = vmatpush1.xpose.msra.mxu0 0.0
        %988 = vmatprep.subr.mxu0 0.0
        %989 = vmatpush1.xpose.msra.mxu0 0.0
        %990 = vmatprep.subr.mxu0 0.0
        %991 = vmatpush1.xpose.msra.mxu0 0.0
        %992 = vmatprep.subr.mxu0 0.0
        %993 = vmatpush1.xpose.msra.mxu0 0.0
        %994 = vmatprep.subr.mxu0 0.0
        %995 = vmatpush1.xpose.msra.mxu0 0.0
        %996 = vmatprep.subr.mxu0 0.0
        %997 = vmatpush1.xpose.msra.mxu0 0.0
        %998 = vmatprep.subr.mxu0 0.0
        %999 = vmatpush1.xpose.msra.mxu0 0.0
        %1000 = vmatprep.subr.mxu0 0.0
        %1001 = vmatpush1.xpose.msra.mxu0 %v970
        %1002 = vmatprep.subr.mxu0 0.0
        %1003 = vmatpush1.xpose.msra.mxu0 %v968
        %1004 = vmatprep.subr.mxu0 0.0
        %1005 = vmatpush2.xpose.msra.mxu0 0.0
        %1006 = vmatprep.subr.mxu0 0.0
        %1007 = vmatpush2.xpose.msra.mxu0 0.0
        %1008 = vmatprep.subr.mxu0 0.0
        %1009 = vmatpush2.xpose.msra.mxu0 0.0
        %1010 = vmatprep.subr.mxu0 0.0
        %1011 = vmatpush2.xpose.msra.mxu0 0.0
        %1012 = vmatprep.subr.mxu0 0.0
        %1013 = vmatpush2.xpose.msra.mxu0 0.0
        %1014 = vmatprep.subr.mxu0 0.0
        %1015 = vmatpush2.xpose.msra.mxu0 0.0
        %1016 = vmatprep.subr.mxu0 0.0
        %1017 = vmatpush2.xpose.msra.mxu0 0.0
        %1018 = vmatprep.subr.mxu0 0.0
        %1019 = vmatpush2.xpose.msra.mxu0 0.0
        %1020 = vmatprep.subr.mxu0 0.0
        %1021 = vmatpush2.xpose.msra.mxu0 0.0
        %1022 = vmatprep.subr.mxu0 0.0
        %1023 = vmatpush2.xpose.msra.mxu0 0.0
        %1024 = vmatprep.subr.mxu0 0.0
        %1025 = vmatpush2.xpose.msra.mxu0 0.0
        %1026 = vmatprep.subr.mxu0 0.0
        %1027 = vmatpush2.xpose.msra.mxu0 0.0
        %1028 = vmatprep.subr.mxu0 0.0
        %1029 = vmatpush2.xpose.msra.mxu0 0.0
        %1030 = vmatprep.subr.mxu0 0.0
        %1031 = vmatpush2.xpose.msra.mxu0 0.0
        %1032 = vmatprep.subr.mxu0 0.0
        %1033 = vmatpush2.xpose.msra.mxu0 0.0
        %1034 = vmatprep.subr.mxu0 0.0
        %1035 = vmatpush2.xpose.msra.mxu0 0.0
        %1036 = vmatprep.mubr.f32.mxu0 0.0
        %1037 = vmatmul.mubr.f32.gmra.mxu0 %v966
        %v1038 = vpop.f32.mrf.mxu0
        %v1039 = vadd.f32 0.0, %v1038
        %v1040 = vpop.f32.mrf.mxu0
        %1041 = vdwg.mxu0
        %1042 = vrot.lane.b32.xlu0 %v507, 120
        %v1043 = vpop.permute.xlu0 %1042
        %1044 = vrot.lane.b32.xlu0 %v609, 120
        %v1045 = vpop.permute.xlu0 %1044
        %1046 = vrot.lane.b32.xlu0 %v614, 120
        %v1047 = vpop.permute.xlu0 %1046
        %v1048 = vsel %vm617, %v1043, 0
        %v1050 = vsel %vm617, %v1045, 0
        %v1052 = vsel %vm617, %v1047, 0
        %1054 = vmatprep.subr.mxu0 0.0
        %1055 = vmatpush1.xpose.msra.mxu0 0.0
        %1056 = vmatprep.subr.mxu0 0.0
        %1057 = vmatpush1.xpose.msra.mxu0 0.0
        %1058 = vmatprep.subr.mxu0 0.0
        %1059 = vmatpush1.xpose.msra.mxu0 0.0
        %1060 = vmatprep.subr.mxu0 0.0
        %1061 = vmatpush1.xpose.msra.mxu0 0.0
        %1062 = vmatprep.subr.mxu0 0.0
        %1063 = vmatpush1.xpose.msra.mxu0 0.0
        %1064 = vmatprep.subr.mxu0 0.0
        %1065 = vmatpush1.xpose.msra.mxu0 0.0
        %1066 = vmatprep.subr.mxu0 0.0
        %1067 = vmatpush1.xpose.msra.mxu0 0.0
        %1068 = vmatprep.subr.mxu0 0.0
        %1069 = vmatpush1.xpose.msra.mxu0 0.0
        %1070 = vmatprep.subr.mxu0 0.0
        %1071 = vmatpush1.xpose.msra.mxu0 0.0
        %1072 = vmatprep.subr.mxu0 0.0
        %1073 = vmatpush1.xpose.msra.mxu0 0.0
        %1074 = vmatprep.subr.mxu0 0.0
        %1075 = vmatpush1.xpose.msra.mxu0 0.0
        %1076 = vmatprep.subr.mxu0 0.0
        %1077 = vmatpush1.xpose.msra.mxu0 0.0
        %1078 = vmatprep.subr.mxu0 0.0
        %1079 = vmatpush1.xpose.msra.mxu0 0.0
        %1080 = vmatprep.subr.mxu0 0.0
        %1081 = vmatpush1.xpose.msra.mxu0 0.0
        %1082 = vmatprep.subr.mxu0 0.0
        %1083 = vmatpush1.xpose.msra.mxu0 %v1052
        %1084 = vmatprep.subr.mxu0 0.0
        %1085 = vmatpush1.xpose.msra.mxu0 %v1050
        %1086 = vmatprep.subr.mxu0 0.0
        %1087 = vmatpush2.xpose.msra.mxu0 0.0
        %1088 = vmatprep.subr.mxu0 0.0
        %1089 = vmatpush2.xpose.msra.mxu0 0.0
        %1090 = vmatprep.subr.mxu0 0.0
        %1091 = vmatpush2.xpose.msra.mxu0 0.0
        %1092 = vmatprep.subr.mxu0 0.0
        %1093 = vmatpush2.xpose.msra.mxu0 0.0
        %1094 = vmatprep.subr.mxu0 0.0
        %1095 = vmatpush2.xpose.msra.mxu0 0.0
        %1096 = vmatprep.subr.mxu0 0.0
        %1097 = vmatpush2.xpose.msra.mxu0 0.0
        %1098 = vmatprep.subr.mxu0 0.0
        %1099 = vmatpush2.xpose.msra.mxu0 0.0
        %1100 = vmatprep.subr.mxu0 0.0
        %1101 = vmatpush2.xpose.msra.mxu0 0.0
        %1102 = vmatprep.subr.mxu0 0.0
        %1103 = vmatpush2.xpose.msra.mxu0 0.0
        %1104 = vmatprep.subr.mxu0 0.0
        %1105 = vmatpush2.xpose.msra.mxu0 0.0
        %1106 = vmatprep.subr.mxu0 0.0
        %1107 = vmatpush2.xpose.msra.mxu0 0.0
        %1108 = vmatprep.subr.mxu0 0.0
        %1109 = vmatpush2.xpose.msra.mxu0 0.0
        %1110 = vmatprep.subr.mxu0 0.0
        %1111 = vmatpush2.xpose.msra.mxu0 0.0
        %1112 = vmatprep.subr.mxu0 0.0
        %1113 = vmatpush2.xpose.msra.mxu0 0.0
        %1114 = vmatprep.subr.mxu0 0.0
        %1115 = vmatpush2.xpose.msra.mxu0 0.0
        %1116 = vmatprep.subr.mxu0 0.0
        %1117 = vmatpush2.xpose.msra.mxu0 0.0
        %1118 = vmatprep.mubr.f32.mxu0 0.0
        %1119 = vmatmul.mubr.f32.gmra.mxu0 %v1048
        %v1120 = vpop.f32.mrf.mxu0
        %v1121 = vadd.f32 0.0, %v1120
        %v1122 = vpop.f32.mrf.mxu0
        %1123 = vdwg.mxu0
        %v1124 = vmul.f32 %v1039, 0.17677669
        %v1125 = vmul.f32 %v1121, 0.17677669
        %v1126 = vsel %vm428, %v1124, -inf
        %1127 = vmax.xlane.f32.xlu0 %v1126
        %v1128 = vpop.xlane.xlu0 %1127
        %v1129 = vsel %vm428, %v1125, -inf
        %1130 = vmax.xlane.f32.xlu0 %v1129
        %v1131 = vpop.xlane.xlu0 %1130
        %v1132 = vsub.f32 %v1124, %v1128
        %v1133 = vsub.f32 %v1125, %v1131
        %v1134 = vmul.f32 %v1132, 1.442695
        %v1135 = vpow.pop %v1134
        %v1136 = vmul.f32 %v1133, 1.442695
        %v1137 = vpow.pop %v1136
        %v1138 = vsel %vm428, %v1135, 0.0
        %1139 = vadd.xlane.f32.xlu0 %v1138
        %v1140 = vpop.xlane.xlu0 %1139
        %v1141 = vsel %vm428, %v1137, 0.0
        %1142 = vadd.xlane.f32.xlu0 %v1141
        %v1143 = vpop.xlane.xlu0 %1142
        %v1144 = vrcp.pop %v1140
        %v1145 = vrcp.pop %v1143
        %v1146 = vmul.f32 %v1135, %v1144
        %v1147 = vmul.f32 %v1137, %v1145
        %1148 = vrot.lane.b32.xlu0 %v599, 88
        %v1149 = vpop.permute.xlu0 %1148
        %1150 = vrot.lane.b32.xlu0 %v604, 88
        %v1151 = vpop.permute.xlu0 %1150
        %v1155 = vsel %vm428, %v1146, 0
        %1157 = vmatprep.subr.mxu0 0.0
        %1158 = vmatpush1.msra.mxu0 0.0
        %1159 = vmatprep.subr.mxu0 0.0
        %1160 = vmatpush1.msra.mxu0 0.0
        %1161 = vmatprep.subr.mxu0 0.0
        %1162 = vmatpush1.msra.mxu0 0.0
        %1163 = vmatprep.subr.mxu0 0.0
        %1164 = vmatpush1.msra.mxu0 0.0
        %1165 = vmatprep.subr.mxu0 0.0
        %1166 = vmatpush1.msra.mxu0 0.0
        %1167 = vmatprep.subr.mxu0 0.0
        %1168 = vmatpush1.msra.mxu0 0.0
        %1169 = vmatprep.subr.mxu0 0.0
        %1170 = vmatpush1.msra.mxu0 0.0
        %1171 = vmatprep.subr.mxu0 0.0
        %1172 = vmatpush1.msra.mxu0 0.0
        %1173 = vmatprep.subr.mxu0 0.0
        %1174 = vmatpush1.msra.mxu0 0.0
        %1175 = vmatprep.subr.mxu0 0.0
        %1176 = vmatpush1.msra.mxu0 0.0
        %1177 = vmatprep.subr.mxu0 0.0
        %1178 = vmatpush1.msra.mxu0 0.0
        %1179 = vmatprep.subr.mxu0 0.0
        %1180 = vmatpush1.msra.mxu0 0.0
        %1181 = vmatprep.subr.mxu0 0.0
        %1182 = vmatpush1.msra.mxu0 0.0
        %1183 = vmatprep.subr.mxu0 0.0
        %1184 = vmatpush1.msra.mxu0 0.0
        %1185 = vmatprep.subr.mxu0 0.0
        %1186 = vmatpush1.msra.mxu0 %v1151
        %1187 = vmatprep.subr.mxu0 0.0
        %1188 = vmatpush1.msra.mxu0 %v1149
        %1189 = vmatprep.subr.mxu0 0.0
        %1190 = vmatpush2.msra.mxu0 0.0
        %1191 = vmatprep.subr.mxu0 0.0
        %1192 = vmatpush2.msra.mxu0 0.0
        %1193 = vmatprep.subr.mxu0 0.0
        %1194 = vmatpush2.msra.mxu0 0.0
        %1195 = vmatprep.subr.mxu0 0.0
        %1196 = vmatpush2.msra.mxu0 0.0
        %1197 = vmatprep.subr.mxu0 0.0
        %1198 = vmatpush2.msra.mxu0 0.0
        %1199 = vmatprep.subr.mxu0 0.0
        %1200 = vmatpush2.msra.mxu0 0.0
        %1201 = vmatprep.subr.mxu0 0.0
        %1202 = vmatpush2.msra.mxu0 0.0
        %1203 = vmatprep.subr.mxu0 0.0
        %1204 = vmatpush2.msra.mxu0 0.0
        %1205 = vmatprep.subr.mxu0 0.0
        %1206 = vmatpush2.msra.mxu0 0.0
        %1207 = vmatprep.subr.mxu0 0.0
        %1208 = vmatpush2.msra.mxu0 0.0
        %1209 = vmatprep.subr.mxu0 0.0
        %1210 = vmatpush2.msra.mxu0 0.0
        %1211 = vmatprep.subr.mxu0 0.0
        %1212 = vmatpush2.msra.mxu0 0.0
        %1213 = vmatprep.subr.mxu0 0.0
        %1214 = vmatpush2.msra.mxu0 0.0
        %1215 = vmatprep.subr.mxu0 0.0
        %1216 = vmatpush2.msra.mxu0 0.0
        %1217 = vmatprep.subr.mxu0 0.0
        %1218 = vmatpush2.msra.mxu0 0.0
        %1219 = vmatprep.subr.mxu0 0.0
        %1220 = vmatpush2.msra.mxu0 0.0
        %1221 = vmatprep.mubr.f32.mxu0 0.0
        %1222 = vmatmul.mubr.f32.gmra.mxu0 %v1155
        %v1223 = vpop.f32.mrf.mxu0
        %v1224 = vadd.f32 0.0, %v1223
        %v1225 = vpop.f32.mrf.mxu0
        %1226 = vdwg.mxu0
        %1227 = vrot.lane.b32.xlu0 %v609, 88
        %v1228 = vpop.permute.xlu0 %1227
        %1229 = vrot.lane.b32.xlu0 %v614, 88
        %v1230 = vpop.permute.xlu0 %1229
        %v1234 = vsel %vm428, %v1147, 0
        %1236 = vmatprep.subr.mxu0 0.0
        %1237 = vmatpush1.msra.mxu0 0.0
        %1238 = vmatprep.subr.mxu0 0.0
        %1239 = vmatpush1.msra.mxu0 0.0
        %1240 = vmatprep.subr.mxu0 0.0
        %1241 = vmatpush1.msra.mxu0 0.0
        %1242 = vmatprep.subr.mxu0 0.0
        %1243 = vmatpush1.msra.mxu0 0.0
        %1244 = vmatprep.subr.mxu0 0.0
        %1245 = vmatpush1.msra.mxu0 0.0
        %1246 = vmatprep.subr.mxu0 0.0
        %1247 = vmatpush1.msra.mxu0 0.0
        %1248 = vmatprep.subr.mxu0 0.0
        %1249 = vmatpush1.msra.mxu0 0.0
        %1250 = vmatprep.subr.mxu0 0.0
        %1251 = vmatpush1.msra.mxu0 0.0
        %1252 = vmatprep.subr.mxu0 0.0
        %1253 = vmatpush1.msra.mxu0 0.0
        %1254 = vmatprep.subr.mxu0 0.0
        %1255 = vmatpush1.msra.mxu0 0.0
        %1256 = vmatprep.subr.mxu0 0.0
        %1257 = vmatpush1.msra.mxu0 0.0
        %1258 = vmatprep.subr.mxu0 0.0
        %1259 = vmatpush1.msra.mxu0 0.0
        %1260 = vmatprep.subr.mxu0 0.0
        %1261 = vmatpush1.msra.mxu0 0.0
        %1262 = vmatprep.subr.mxu0 0.0
        %1263 = vmatpush1.msra.mxu0 0.0
        %1264 = vmatprep.subr.mxu0 0.0
        %1265 = vmatpush1.msra.mxu0 %v1230
        %1266 = vmatprep.subr.mxu0 0.0
        %1267 = vmatpush1.msra.mxu0 %v1228
        %1268 = vmatprep.subr.mxu0 0.0
        %1269 = vmatpush2.msra.mxu0 0.0
        %1270 = vmatprep.subr.mxu0 0.0
        %1271 = vmatpush2.msra.mxu0 0.0
        %1272 = vmatprep.subr.mxu0 0.0
        %1273 = vmatpush2.msra.mxu0 0.0
        %1274 = vmatprep.subr.mxu0 0.0
        %1275 = vmatpush2.msra.mxu0 0.0
        %1276 = vmatprep.subr.mxu0 0.0
        %1277 = vmatpush2.msra.mxu0 0.0
        %1278 = vmatprep.subr.mxu0 0.0
        %1279 = vmatpush2.msra.mxu0 0.0
        %1280 = vmatprep.subr.mxu0 0.0
        %1281 = vmatpush2.msra.mxu0 0.0
        %1282 = vmatprep.subr.mxu0 0.0
        %1283 = vmatpush2.msra.mxu0 0.0
        %1284 = vmatprep.subr.mxu0 0.0
        %1285 = vmatpush2.msra.mxu0 0.0
        %1286 = vmatprep.subr.mxu0 0.0
        %1287 = vmatpush2.msra.mxu0 0.0
        %1288 = vmatprep.subr.mxu0 0.0
        %1289 = vmatpush2.msra.mxu0 0.0
        %1290 = vmatprep.subr.mxu0 0.0
        %1291 = vmatpush2.msra.mxu0 0.0
        %1292 = vmatprep.subr.mxu0 0.0
        %1293 = vmatpush2.msra.mxu0 0.0
        %1294 = vmatprep.subr.mxu0 0.0
        %1295 = vmatpush2.msra.mxu0 0.0
        %1296 = vmatprep.subr.mxu0 0.0
        %1297 = vmatpush2.msra.mxu0 0.0
        %1298 = vmatprep.subr.mxu0 0.0
        %1299 = vmatpush2.msra.mxu0 0.0
        %1300 = vmatprep.mubr.f32.mxu0 0.0
        %1301 = vmatmul.mubr.f32.gmra.mxu0 %v1234
        %v1302 = vpop.f32.mrf.mxu0
        %v1303 = vadd.f32 0.0, %v1302
        %v1304 = vpop.f32.mrf.mxu0
        %1305 = vdwg.mxu0
        %1308 = vrot.lane.b32.xlu0 %v1224, 8
        %v1309 = vpop.permute.xlu0 %1308
        %1310 = vrot.lane.b32.xlu0 %v1303, 8
        %v1311 = vpop.permute.xlu0 %1310
        %v1314 = vadd.f32 %v502, %v1309
        %v1315 = vadd.f32 %v507, %v1311
        %1316 = vrot.lane.b32.xlu0 %v502, 112
        %v1317 = vpop.permute.xlu0 %1316
        %1318 = vrot.lane.b32.xlu0 %v599, 112
        %v1319 = vpop.permute.xlu0 %1318
        %1320 = vrot.lane.b32.xlu0 %v604, 112
        %v1321 = vpop.permute.xlu0 %1320
        %v1322 = vsel %vm617, %v1317, 0
        %v1324 = vsel %vm617, %v1319, 0
        %v1326 = vsel %vm617, %v1321, 0
        %1328 = vmatprep.subr.mxu0 0.0
        %1329 = vmatpush1.xpose.msra.mxu0 0.0
        %1330 = vmatprep.subr.mxu0 0.0
        %1331 = vmatpush1.xpose.msra.mxu0 0.0
        %1332 = vmatprep.subr.mxu0 0.0
        %1333 = vmatpush1.xpose.msra.mxu0 0.0
        %1334 = vmatprep.subr.mxu0 0.0
        %1335 = vmatpush1.xpose.msra.mxu0 0.0
        %1336 = vmatprep.subr.mxu0 0.0
        %1337 = vmatpush1.xpose.msra.mxu0 0.0
        %1338 = vmatprep.subr.mxu0 0.0
        %1339 = vmatpush1.xpose.msra.mxu0 0.0
        %1340 = vmatprep.subr.mxu0 0.0
        %1341 = vmatpush1.xpose.msra.mxu0 0.0
        %1342 = vmatprep.subr.mxu0 0.0
        %1343 = vmatpush1.xpose.msra.mxu0 0.0
        %1344 = vmatprep.subr.mxu0 0.0
        %1345 = vmatpush1.xpose.msra.mxu0 0.0
        %1346 = vmatprep.subr.mxu0 0.0
        %1347 = vmatpush1.xpose.msra.mxu0 0.0
        %1348 = vmatprep.subr.mxu0 0.0
        %1349 = vmatpush1.xpose.msra.mxu0 0.0
        %1350 = vmatprep.subr.mxu0 0.0
        %1351 = vmatpush1.xpose.msra.mxu0 0.0
        %1352 = vmatprep.subr.mxu0 0.0
        %1353 = vmatpush1.xpose.msra.mxu0 0.0
        %1354 = vmatprep.subr.mxu0 0.0
        %1355 = vmatpush1.xpose.msra.mxu0 0.0
        %1356 = vmatprep.subr.mxu0 0.0
        %1357 = vmatpush1.xpose.msra.mxu0 %v1326
        %1358 = vmatprep.subr.mxu0 0.0
        %1359 = vmatpush1.xpose.msra.mxu0 %v1324
        %1360 = vmatprep.subr.mxu0 0.0
        %1361 = vmatpush2.xpose.msra.mxu0 0.0
        %1362 = vmatprep.subr.mxu0 0.0
        %1363 = vmatpush2.xpose.msra.mxu0 0.0
        %1364 = vmatprep.subr.mxu0 0.0
        %1365 = vmatpush2.xpose.msra.mxu0 0.0
        %1366 = vmatprep.subr.mxu0 0.0
        %1367 = vmatpush2.xpose.msra.mxu0 0.0
        %1368 = vmatprep.subr.mxu0 0.0
        %1369 = vmatpush2.xpose.msra.mxu0 0.0
        %1370 = vmatprep.subr.mxu0 0.0
        %1371 = vmatpush2.xpose.msra.mxu0 0.0
        %1372 = vmatprep.subr.mxu0 0.0
        %1373 = vmatpush2.xpose.msra.mxu0 0.0
        %1374 = vmatprep.subr.mxu0 0.0
        %1375 = vmatpush2.xpose.msra.mxu0 0.0
        %1376 = vmatprep.subr.mxu0 0.0
        %1377 = vmatpush2.xpose.msra.mxu0 0.0
        %1378 = vmatprep.subr.mxu0 0.0
        %1379 = vmatpush2.xpose.msra.mxu0 0.0
        %1380 = vmatprep.subr.mxu0 0.0
        %1381 = vmatpush2.xpose.msra.mxu0 0.0
        %1382 = vmatprep.subr.mxu0 0.0
        %1383 = vmatpush2.xpose.msra.mxu0 0.0
        %1384 = vmatprep.subr.mxu0 0.0
        %1385 = vmatpush2.xpose.msra.mxu0 0.0
        %1386 = vmatprep.subr.mxu0 0.0
        %1387 = vmatpush2.xpose.msra.mxu0 0.0
        %1388 = vmatprep.subr.mxu0 0.0
        %1389 = vmatpush2.xpose.msra.mxu0 0.0
        %1390 = vmatprep.subr.mxu0 0.0
        %1391 = vmatpush2.xpose.msra.mxu0 0.0
        %1392 = vmatprep.mubr.f32.mxu0 0.0
        %1393 = vmatmul.mubr.f32.gmra.mxu0 %v1322
        %v1394 = vpop.f32.mrf.mxu0
        %v1395 = vadd.f32 0.0, %v1394
        %v1396 = vpop.f32.mrf.mxu0
        %1397 = vdwg.mxu0
        %1398 = vrot.lane.b32.xlu0 %v507, 112
        %v1399 = vpop.permute.xlu0 %1398
        %1400 = vrot.lane.b32.xlu0 %v609, 112
        %v1401 = vpop.permute.xlu0 %1400
        %1402 = vrot.lane.b32.xlu0 %v614, 112
        %v1403 = vpop.permute.xlu0 %1402
        %v1404 = vsel %vm617, %v1399, 0
        %v1406 = vsel %vm617, %v1401, 0
        %v1408 = vsel %vm617, %v1403, 0
        %1410 = vmatprep.subr.mxu0 0.0
        %1411 = vmatpush1.xpose.msra.mxu0 0.0
        %1412 = vmatprep.subr.mxu0 0.0
        %1413 = vmatpush1.xpose.msra.mxu0 0.0
        %1414 = vmatprep.subr.mxu0 0.0
        %1415 = vmatpush1.xpose.msra.mxu0 0.0
        %1416 = vmatprep.subr.mxu0 0.0
        %1417 = vmatpush1.xpose.msra.mxu0 0.0
        %1418 = vmatprep.subr.mxu0 0.0
        %1419 = vmatpush1.xpose.msra.mxu0 0.0
        %1420 = vmatprep.subr.mxu0 0.0
        %1421 = vmatpush1.xpose.msra.mxu0 0.0
        %1422 = vmatprep.subr.mxu0 0.0
        %1423 = vmatpush1.xpose.msra.mxu0 0.0
        %1424 = vmatprep.subr.mxu0 0.0
        %1425 = vmatpush1.xpose.msra.mxu0 0.0
        %1426 = vmatprep.subr.mxu0 0.0
        %1427 = vmatpush1.xpose.msra.mxu0 0.0
        %1428 = vmatprep.subr.mxu0 0.0
        %1429 = vmatpush1.xpose.msra.mxu0 0.0
        %1430 = vmatprep.subr.mxu0 0.0
        %1431 = vmatpush1.xpose.msra.mxu0 0.0
        %1432 = vmatprep.subr.mxu0 0.0
        %1433 = vmatpush1.xpose.msra.mxu0 0.0
        %1434 = vmatprep.subr.mxu0 0.0
        %1435 = vmatpush1.xpose.msra.mxu0 0.0
        %1436 = vmatprep.subr.mxu0 0.0
        %1437 = vmatpush1.xpose.msra.mxu0 0.0
        %1438 = vmatprep.subr.mxu0 0.0
        %1439 = vmatpush1.xpose.msra.mxu0 %v1408
        %1440 = vmatprep.subr.mxu0 0.0
        %1441 = vmatpush1.xpose.msra.mxu0 %v1406
        %1442 = vmatprep.subr.mxu0 0.0
        %1443 = vmatpush2.xpose.msra.mxu0 0.0
        %1444 = vmatprep.subr.mxu0 0.0
        %1445 = vmatpush2.xpose.msra.mxu0 0.0
        %1446 = vmatprep.subr.mxu0 0.0
        %1447 = vmatpush2.xpose.msra.mxu0 0.0
        %1448 = vmatprep.subr.mxu0 0.0
        %1449 = vmatpush2.xpose.msra.mxu0 0.0
        %1450 = vmatprep.subr.mxu0 0.0
        %1451 = vmatpush2.xpose.msra.mxu0 0.0
        %1452 = vmatprep.subr.mxu0 0.0
        %1453 = vmatpush2.xpose.msra.mxu0 0.0
        %1454 = vmatprep.subr.mxu0 0.0
        %1455 = vmatpush2.xpose.msra.mxu0 0.0
        %1456 = vmatprep.subr.mxu0 0.0
        %1457 = vmatpush2.xpose.msra.mxu0 0.0
        %1458 = vmatprep.subr.mxu0 0.0
        %1459 = vmatpush2.xpose.msra.mxu0 0.0
        %1460 = vmatprep.subr.mxu0 0.0
        %1461 = vmatpush2.xpose.msra.mxu0 0.0
        %1462 = vmatprep.subr.mxu0 0.0
        %1463 = vmatpush2.xpose.msra.mxu0 0.0
        %1464 = vmatprep.subr.mxu0 0.0
        %1465 = vmatpush2.xpose.msra.mxu0 0.0
        %1466 = vmatprep.subr.mxu0 0.0
        %1467 = vmatpush2.xpose.msra.mxu0 0.0
        %1468 = vmatprep.subr.mxu0 0.0
        %1469 = vmatpush2.xpose.msra.mxu0 0.0
        %1470 = vmatprep.subr.mxu0 0.0
        %1471 = vmatpush2.xpose.msra.mxu0 0.0
        %1472 = vmatprep.subr.mxu0 0.0
        %1473 = vmatpush2.xpose.msra.mxu0 0.0
        %1474 = vmatprep.mubr.f32.mxu0 0.0
        %1475 = vmatmul.mubr.f32.gmra.mxu0 %v1404
        %v1476 = vpop.f32.mrf.mxu0
        %v1477 = vadd.f32 0.0, %v1476
        %v1478 = vpop.f32.mrf.mxu0
        %1479 = vdwg.mxu0
        %v1480 = vmul.f32 %v1395, 0.17677669
        %v1481 = vmul.f32 %v1477, 0.17677669
        %v1482 = vsel %vm428, %v1480, -inf
        %1483 = vmax.xlane.f32.xlu0 %v1482
        %v1484 = vpop.xlane.xlu0 %1483
        %v1485 = vsel %vm428, %v1481, -inf
        %1486 = vmax.xlane.f32.xlu0 %v1485
        %v1487 = vpop.xlane.xlu0 %1486
        %v1488 = vsub.f32 %v1480, %v1484
        %v1489 = vsub.f32 %v1481, %v1487
        %v1490 = vmul.f32 %v1488, 1.442695
        %v1491 = vpow.pop %v1490
        %v1492 = vmul.f32 %v1489, 1.442695
        %v1493 = vpow.pop %v1492
        %v1494 = vsel %vm428, %v1491, 0.0
        %1495 = vadd.xlane.f32.xlu0 %v1494
        %v1496 = vpop.xlane.xlu0 %1495
        %v1497 = vsel %vm428, %v1493, 0.0
        %1498 = vadd.xlane.f32.xlu0 %v1497
        %v1499 = vpop.xlane.xlu0 %1498
        %v1500 = vrcp.pop %v1496
        %v1501 = vrcp.pop %v1499
        %v1502 = vmul.f32 %v1491, %v1500
        %v1503 = vmul.f32 %v1493, %v1501
        %1504 = vrot.lane.b32.xlu0 %v599, 80
        %v1505 = vpop.permute.xlu0 %1504
        %1506 = vrot.lane.b32.xlu0 %v604, 80
        %v1507 = vpop.permute.xlu0 %1506
        %v1511 = vsel %vm428, %v1502, 0
        %1513 = vmatprep.subr.mxu0 0.0
        %1514 = vmatpush1.msra.mxu0 0.0
        %1515 = vmatprep.subr.mxu0 0.0
        %1516 = vmatpush1.msra.mxu0 0.0
        %1517 = vmatprep.subr.mxu0 0.0
        %1518 = vmatpush1.msra.mxu0 0.0
        %1519 = vmatprep.subr.mxu0 0.0
        %1520 = vmatpush1.msra.mxu0 0.0
        %1521 = vmatprep.subr.mxu0 0.0
        %1522 = vmatpush1.msra.mxu0 0.0
        %1523 = vmatprep.subr.mxu0 0.0
        %1524 = vmatpush1.msra.mxu0 0.0
        %1525 = vmatprep.subr.mxu0 0.0
        %1526 = vmatpush1.msra.mxu0 0.0
        %1527 = vmatprep.subr.mxu0 0.0
        %1528 = vmatpush1.msra.mxu0 0.0
        %1529 = vmatprep.subr.mxu0 0.0
        %1530 = vmatpush1.msra.mxu0 0.0
        %1531 = vmatprep.subr.mxu0 0.0
        %1532 = vmatpush1.msra.mxu0 0.0
        %1533 = vmatprep.subr.mxu0 0.0
        %1534 = vmatpush1.msra.mxu0 0.0
        %1535 = vmatprep.subr.mxu0 0.0
        %1536 = vmatpush1.msra.mxu0 0.0
        %1537 = vmatprep.subr.mxu0 0.0
        %1538 = vmatpush1.msra.mxu0 0.0
        %1539 = vmatprep.subr.mxu0 0.0
        %1540 = vmatpush1.msra.mxu0 0.0
        %1541 = vmatprep.subr.mxu0 0.0
        %1542 = vmatpush1.msra.mxu0 %v1507
        %1543 = vmatprep.subr.mxu0 0.0
        %1544 = vmatpush1.msra.mxu0 %v1505
        %1545 = vmatprep.subr.mxu0 0.0
        %1546 = vmatpush2.msra.mxu0 0.0
        %1547 = vmatprep.subr.mxu0 0.0
        %1548 = vmatpush2.msra.mxu0 0.0
        %1549 = vmatprep.subr.mxu0 0.0
        %1550 = vmatpush2.msra.mxu0 0.0
        %1551 = vmatprep.subr.mxu0 0.0
        %1552 = vmatpush2.msra.mxu0 0.0
        %1553 = vmatprep.subr.mxu0 0.0
        %1554 = vmatpush2.msra.mxu0 0.0
        %1555 = vmatprep.subr.mxu0 0.0
        %1556 = vmatpush2.msra.mxu0 0.0
        %1557 = vmatprep.subr.mxu0 0.0
        %1558 = vmatpush2.msra.mxu0 0.0
        %1559 = vmatprep.subr.mxu0 0.0
        %1560 = vmatpush2.msra.mxu0 0.0
        %1561 = vmatprep.subr.mxu0 0.0
        %1562 = vmatpush2.msra.mxu0 0.0
        %1563 = vmatprep.subr.mxu0 0.0
        %1564 = vmatpush2.msra.mxu0 0.0
        %1565 = vmatprep.subr.mxu0 0.0
        %1566 = vmatpush2.msra.mxu0 0.0
        %1567 = vmatprep.subr.mxu0 0.0
        %1568 = vmatpush2.msra.mxu0 0.0
        %1569 = vmatprep.subr.mxu0 0.0
        %1570 = vmatpush2.msra.mxu0 0.0
        %1571 = vmatprep.subr.mxu0 0.0
        %1572 = vmatpush2.msra.mxu0 0.0
        %1573 = vmatprep.subr.mxu0 0.0
        %1574 = vmatpush2.msra.mxu0 0.0
        %1575 = vmatprep.subr.mxu0 0.0
        %1576 = vmatpush2.msra.mxu0 0.0
        %1577 = vmatprep.mubr.f32.mxu0 0.0
        %1578 = vmatmul.mubr.f32.gmra.mxu0 %v1511
        %v1579 = vpop.f32.mrf.mxu0
        %v1580 = vadd.f32 0.0, %v1579
        %v1581 = vpop.f32.mrf.mxu0
        %1582 = vdwg.mxu0
        %1583 = vrot.lane.b32.xlu0 %v609, 80
        %v1584 = vpop.permute.xlu0 %1583
        %1585 = vrot.lane.b32.xlu0 %v614, 80
        %v1586 = vpop.permute.xlu0 %1585
        %v1590 = vsel %vm428, %v1503, 0
        %1592 = vmatprep.subr.mxu0 0.0
        %1593 = vmatpush1.msra.mxu0 0.0
        %1594 = vmatprep.subr.mxu0 0.0
        %1595 = vmatpush1.msra.mxu0 0.0
        %1596 = vmatprep.subr.mxu0 0.0
        %1597 = vmatpush1.msra.mxu0 0.0
        %1598 = vmatprep.subr.mxu0 0.0
        %1599 = vmatpush1.msra.mxu0 0.0
        %1600 = vmatprep.subr.mxu0 0.0
        %1601 = vmatpush1.msra.mxu0 0.0
        %1602 = vmatprep.subr.mxu0 0.0
        %1603 = vmatpush1.msra.mxu0 0.0
        %1604 = vmatprep.subr.mxu0 0.0
        %1605 = vmatpush1.msra.mxu0 0.0
        %1606 = vmatprep.subr.mxu0 0.0
        %1607 = vmatpush1.msra.mxu0 0.0
        %1608 = vmatprep.subr.mxu0 0.0
        %1609 = vmatpush1.msra.mxu0 0.0
        %1610 = vmatprep.subr.mxu0 0.0
        %1611 = vmatpush1.msra.mxu0 0.0
        %1612 = vmatprep.subr.mxu0 0.0
        %1613 = vmatpush1.msra.mxu0 0.0
        %1614 = vmatprep.subr.mxu0 0.0
        %1615 = vmatpush1.msra.mxu0 0.0
        %1616 = vmatprep.subr.mxu0 0.0
        %1617 = vmatpush1.msra.mxu0 0.0
        %1618 = vmatprep.subr.mxu0 0.0
        %1619 = vmatpush1.msra.mxu0 0.0
        %1620 = vmatprep.subr.mxu0 0.0
        %1621 = vmatpush1.msra.mxu0 %v1586
        %1622 = vmatprep.subr.mxu0 0.0
        %1623 = vmatpush1.msra.mxu0 %v1584
        %1624 = vmatprep.subr.mxu0 0.0
        %1625 = vmatpush2.msra.mxu0 0.0
        %1626 = vmatprep.subr.mxu0 0.0
        %1627 = vmatpush2.msra.mxu0 0.0
        %1628 = vmatprep.subr.mxu0 0.0
        %1629 = vmatpush2.msra.mxu0 0.0
        %1630 = vmatprep.subr.mxu0 0.0
        %1631 = vmatpush2.msra.mxu0 0.0
        %1632 = vmatprep.subr.mxu0 0.0
        %1633 = vmatpush2.msra.mxu0 0.0
        %1634 = vmatprep.subr.mxu0 0.0
        %1635 = vmatpush2.msra.mxu0 0.0
        %1636 = vmatprep.subr.mxu0 0.0
        %1637 = vmatpush2.msra.mxu0 0.0
        %1638 = vmatprep.subr.mxu0 0.0
        %1639 = vmatpush2.msra.mxu0 0.0
        %1640 = vmatprep.subr.mxu0 0.0
        %1641 = vmatpush2.msra.mxu0 0.0
        %1642 = vmatprep.subr.mxu0 0.0
        %1643 = vmatpush2.msra.mxu0 0.0
        %1644 = vmatprep.subr.mxu0 0.0
        %1645 = vmatpush2.msra.mxu0 0.0
        %1646 = vmatprep.subr.mxu0 0.0
        %1647 = vmatpush2.msra.mxu0 0.0
        %1648 = vmatprep.subr.mxu0 0.0
        %1649 = vmatpush2.msra.mxu0 0.0
        %1650 = vmatprep.subr.mxu0 0.0
        %1651 = vmatpush2.msra.mxu0 0.0
        %1652 = vmatprep.subr.mxu0 0.0
        %1653 = vmatpush2.msra.mxu0 0.0
        %1654 = vmatprep.subr.mxu0 0.0
        %1655 = vmatpush2.msra.mxu0 0.0
        %1656 = vmatprep.mubr.f32.mxu0 0.0
        %1657 = vmatmul.mubr.f32.gmra.mxu0 %v1590
        %v1658 = vpop.f32.mrf.mxu0
        %v1659 = vadd.f32 0.0, %v1658
        %v1660 = vpop.f32.mrf.mxu0
        %1661 = vdwg.mxu0
        %1664 = vrot.lane.b32.xlu0 %v1580, 16
        %v1665 = vpop.permute.xlu0 %1664
        %1666 = vrot.lane.b32.xlu0 %v1659, 16
        %v1667 = vpop.permute.xlu0 %1666
        %v1670 = vadd.f32 %v502, %v1665
        %v1671 = vadd.f32 %v507, %v1667
        %1672 = vrot.lane.b32.xlu0 %v502, 104
        %v1673 = vpop.permute.xlu0 %1672
        %1674 = vrot.lane.b32.xlu0 %v599, 104
        %v1675 = vpop.permute.xlu0 %1674
        %1676 = vrot.lane.b32.xlu0 %v604, 104
        %v1677 = vpop.permute.xlu0 %1676
        %v1678 = vsel %vm617, %v1673, 0
        %v1680 = vsel %vm617, %v1675, 0
        %v1682 = vsel %vm617, %v1677, 0
        %1684 = vmatprep.subr.mxu0 0.0
        %1685 = vmatpush1.xpose.msra.mxu0 0.0
        %1686 = vmatprep.subr.mxu0 0.0
        %1687 = vmatpush1.xpose.msra.mxu0 0.0
        %1688 = vmatprep.subr.mxu0 0.0
        %1689 = vmatpush1.xpose.msra.mxu0 0.0
        %1690 = vmatprep.subr.mxu0 0.0
        %1691 = vmatpush1.xpose.msra.mxu0 0.0
        %1692 = vmatprep.subr.mxu0 0.0
        %1693 = vmatpush1.xpose.msra.mxu0 0.0
        %1694 = vmatprep.subr.mxu0 0.0
        %1695 = vmatpush1.xpose.msra.mxu0 0.0
        %1696 = vmatprep.subr.mxu0 0.0
        %1697 = vmatpush1.xpose.msra.mxu0 0.0
        %1698 = vmatprep.subr.mxu0 0.0
        %1699 = vmatpush1.xpose.msra.mxu0 0.0
        %1700 = vmatprep.subr.mxu0 0.0
        %1701 = vmatpush1.xpose.msra.mxu0 0.0
        %1702 = vmatprep.subr.mxu0 0.0
        %1703 = vmatpush1.xpose.msra.mxu0 0.0
        %1704 = vmatprep.subr.mxu0 0.0
        %1705 = vmatpush1.xpose.msra.mxu0 0.0
        %1706 = vmatprep.subr.mxu0 0.0
        %1707 = vmatpush1.xpose.msra.mxu0 0.0
        %1708 = vmatprep.subr.mxu0 0.0
        %1709 = vmatpush1.xpose.msra.mxu0 0.0
        %1710 = vmatprep.subr.mxu0 0.0
        %1711 = vmatpush1.xpose.msra.mxu0 0.0
        %1712 = vmatprep.subr.mxu0 0.0
        %1713 = vmatpush1.xpose.msra.mxu0 %v1682
        %1714 = vmatprep.subr.mxu0 0.0
        %1715 = vmatpush1.xpose.msra.mxu0 %v1680
        %1716 = vmatprep.subr.mxu0 0.0
        %1717 = vmatpush2.xpose.msra.mxu0 0.0
        %1718 = vmatprep.subr.mxu0 0.0
        %1719 = vmatpush2.xpose.msra.mxu0 0.0
        %1720 = vmatprep.subr.mxu0 0.0
        %1721 = vmatpush2.xpose.msra.mxu0 0.0
        %1722 = vmatprep.subr.mxu0 0.0
        %1723 = vmatpush2.xpose.msra.mxu0 0.0
        %1724 = vmatprep.subr.mxu0 0.0
        %1725 = vmatpush2.xpose.msra.mxu0 0.0
        %1726 = vmatprep.subr.mxu0 0.0
        %1727 = vmatpush2.xpose.msra.mxu0 0.0
        %1728 = vmatprep.subr.mxu0 0.0
        %1729 = vmatpush2.xpose.msra.mxu0 0.0
        %1730 = vmatprep.subr.mxu0 0.0
        %1731 = vmatpush2.xpose.msra.mxu0 0.0
        %1732 = vmatprep.subr.mxu0 0.0
        %1733 = vmatpush2.xpose.msra.mxu0 0.0
        %1734 = vmatprep.subr.mxu0 0.0
        %1735 = vmatpush2.xpose.msra.mxu0 0.0
        %1736 = vmatprep.subr.mxu0 0.0
        %1737 = vmatpush2.xpose.msra.mxu0 0.0
        %1738 = vmatprep.subr.mxu0 0.0
        %1739 = vmatpush2.xpose.msra.mxu0 0.0
        %1740 = vmatprep.subr.mxu0 0.0
        %1741 = vmatpush2.xpose.msra.mxu0 0.0
        %1742 = vmatprep.subr.mxu0 0.0
        %1743 = vmatpush2.xpose.msra.mxu0 0.0
        %1744 = vmatprep.subr.mxu0 0.0
        %1745 = vmatpush2.xpose.msra.mxu0 0.0
        %1746 = vmatprep.subr.mxu0 0.0
        %1747 = vmatpush2.xpose.msra.mxu0 0.0
        %1748 = vmatprep.mubr.f32.mxu0 0.0
        %1749 = vmatmul.mubr.f32.gmra.mxu0 %v1678
        %v1750 = vpop.f32.mrf.mxu0
        %v1751 = vadd.f32 0.0, %v1750
        %v1752 = vpop.f32.mrf.mxu0
        %1753 = vdwg.mxu0
        %1754 = vrot.lane.b32.xlu0 %v507, 104
        %v1755 = vpop.permute.xlu0 %1754
        %1756 = vrot.lane.b32.xlu0 %v609, 104
        %v1757 = vpop.permute.xlu0 %1756
        %1758 = vrot.lane.b32.xlu0 %v614, 104
        %v1759 = vpop.permute.xlu0 %1758
        %v1760 = vsel %vm617, %v1755, 0
        %v1762 = vsel %vm617, %v1757, 0
        %v1764 = vsel %vm617, %v1759, 0
        %1766 = vmatprep.subr.mxu0 0.0
        %1767 = vmatpush1.xpose.msra.mxu0 0.0
        %1768 = vmatprep.subr.mxu0 0.0
        %1769 = vmatpush1.xpose.msra.mxu0 0.0
        %1770 = vmatprep.subr.mxu0 0.0
        %1771 = vmatpush1.xpose.msra.mxu0 0.0
        %1772 = vmatprep.subr.mxu0 0.0
        %1773 = vmatpush1.xpose.msra.mxu0 0.0
        %1774 = vmatprep.subr.mxu0 0.0
        %1775 = vmatpush1.xpose.msra.mxu0 0.0
        %1776 = vmatprep.subr.mxu0 0.0
        %1777 = vmatpush1.xpose.msra.mxu0 0.0
        %1778 = vmatprep.subr.mxu0 0.0
        %1779 = vmatpush1.xpose.msra.mxu0 0.0
        %1780 = vmatprep.subr.mxu0 0.0
        %1781 = vmatpush1.xpose.msra.mxu0 0.0
        %1782 = vmatprep.subr.mxu0 0.0
        %1783 = vmatpush1.xpose.msra.mxu0 0.0
        %1784 = vmatprep.subr.mxu0 0.0
        %1785 = vmatpush1.xpose.msra.mxu0 0.0
        %1786 = vmatprep.subr.mxu0 0.0
        %1787 = vmatpush1.xpose.msra.mxu0 0.0
        %1788 = vmatprep.subr.mxu0 0.0
        %1789 = vmatpush1.xpose.msra.mxu0 0.0
        %1790 = vmatprep.subr.mxu0 0.0
        %1791 = vmatpush1.xpose.msra.mxu0 0.0
        %1792 = vmatprep.subr.mxu0 0.0
        %1793 = vmatpush1.xpose.msra.mxu0 0.0
        %1794 = vmatprep.subr.mxu0 0.0
        %1795 = vmatpush1.xpose.msra.mxu0 %v1764
        %1796 = vmatprep.subr.mxu0 0.0
        %1797 = vmatpush1.xpose.msra.mxu0 %v1762
        %1798 = vmatprep.subr.mxu0 0.0
        %1799 = vmatpush2.xpose.msra.mxu0 0.0
        %1800 = vmatprep.subr.mxu0 0.0
        %1801 = vmatpush2.xpose.msra.mxu0 0.0
        %1802 = vmatprep.subr.mxu0 0.0
        %1803 = vmatpush2.xpose.msra.mxu0 0.0
        %1804 = vmatprep.subr.mxu0 0.0
        %1805 = vmatpush2.xpose.msra.mxu0 0.0
        %1806 = vmatprep.subr.mxu0 0.0
        %1807 = vmatpush2.xpose.msra.mxu0 0.0
        %1808 = vmatprep.subr.mxu0 0.0
        %1809 = vmatpush2.xpose.msra.mxu0 0.0
        %1810 = vmatprep.subr.mxu0 0.0
        %1811 = vmatpush2.xpose.msra.mxu0 0.0
        %1812 = vmatprep.subr.mxu0 0.0
        %1813 = vmatpush2.xpose.msra.mxu0 0.0
        %1814 = vmatprep.subr.mxu0 0.0
        %1815 = vmatpush2.xpose.msra.mxu0 0.0
        %1816 = vmatprep.subr.mxu0 0.0
        %1817 = vmatpush2.xpose.msra.mxu0 0.0
        %1818 = vmatprep.subr.mxu0 0.0
        %1819 = vmatpush2.xpose.msra.mxu0 0.0
        %1820 = vmatprep.subr.mxu0 0.0
        %1821 = vmatpush2.xpose.msra.mxu0 0.0
        %1822 = vmatprep.subr.mxu0 0.0
        %1823 = vmatpush2.xpose.msra.mxu0 0.0
        %1824 = vmatprep.subr.mxu0 0.0
        %1825 = vmatpush2.xpose.msra.mxu0 0.0
        %1826 = vmatprep.subr.mxu0 0.0
        %1827 = vmatpush2.xpose.msra.mxu0 0.0
        %1828 = vmatprep.subr.mxu0 0.0
        %1829 = vmatpush2.xpose.msra.mxu0 0.0
        %1830 = vmatprep.mubr.f32.mxu0 0.0
        %1831 = vmatmul.mubr.f32.gmra.mxu0 %v1760
        %v1832 = vpop.f32.mrf.mxu0
        %v1833 = vadd.f32 0.0, %v1832
        %v1834 = vpop.f32.mrf.mxu0
        %1835 = vdwg.mxu0
        %v1836 = vmul.f32 %v1751, 0.17677669
        %v1837 = vmul.f32 %v1833, 0.17677669
        %v1838 = vsel %vm428, %v1836, -inf
        %1839 = vmax.xlane.f32.xlu0 %v1838
        %v1840 = vpop.xlane.xlu0 %1839
        %v1841 = vsel %vm428, %v1837, -inf
        %1842 = vmax.xlane.f32.xlu0 %v1841
        %v1843 = vpop.xlane.xlu0 %1842
        %v1844 = vsub.f32 %v1836, %v1840
        %v1845 = vsub.f32 %v1837, %v1843
        %v1846 = vmul.f32 %v1844, 1.442695
        %v1847 = vpow.pop %v1846
        %v1848 = vmul.f32 %v1845, 1.442695
        %v1849 = vpow.pop %v1848
        %v1850 = vsel %vm428, %v1847, 0.0
        %1851 = vadd.xlane.f32.xlu0 %v1850
        %v1852 = vpop.xlane.xlu0 %1851
        %v1853 = vsel %vm428, %v1849, 0.0
        %1854 = vadd.xlane.f32.xlu0 %v1853
        %v1855 = vpop.xlane.xlu0 %1854
        %v1856 = vrcp.pop %v1852
        %v1857 = vrcp.pop %v1855
        %v1858 = vmul.f32 %v1847, %v1856
        %v1859 = vmul.f32 %v1849, %v1857
        %1860 = vrot.lane.b32.xlu0 %v599, 72
        %v1861 = vpop.permute.xlu0 %1860
        %1862 = vrot.lane.b32.xlu0 %v604, 72
        %v1863 = vpop.permute.xlu0 %1862
        %v1867 = vsel %vm428, %v1858, 0
        %1869 = vmatprep.subr.mxu0 0.0
        %1870 = vmatpush1.msra.mxu0 0.0
        %1871 = vmatprep.subr.mxu0 0.0
        %1872 = vmatpush1.msra.mxu0 0.0
        %1873 = vmatprep.subr.mxu0 0.0
        %1874 = vmatpush1.msra.mxu0 0.0
        %1875 = vmatprep.subr.mxu0 0.0
        %1876 = vmatpush1.msra.mxu0 0.0
        %1877 = vmatprep.subr.mxu0 0.0
        %1878 = vmatpush1.msra.mxu0 0.0
        %1879 = vmatprep.subr.mxu0 0.0
        %1880 = vmatpush1.msra.mxu0 0.0
        %1881 = vmatprep.subr.mxu0 0.0
        %1882 = vmatpush1.msra.mxu0 0.0
        %1883 = vmatprep.subr.mxu0 0.0
        %1884 = vmatpush1.msra.mxu0 0.0
        %1885 = vmatprep.subr.mxu0 0.0
        %1886 = vmatpush1.msra.mxu0 0.0
        %1887 = vmatprep.subr.mxu0 0.0
        %1888 = vmatpush1.msra.mxu0 0.0
        %1889 = vmatprep.subr.mxu0 0.0
        %1890 = vmatpush1.msra.mxu0 0.0
        %1891 = vmatprep.subr.mxu0 0.0
        %1892 = vmatpush1.msra.mxu0 0.0
        %1893 = vmatprep.subr.mxu0 0.0
        %1894 = vmatpush1.msra.mxu0 0.0
        %1895 = vmatprep.subr.mxu0 0.0
        %1896 = vmatpush1.msra.mxu0 0.0
        %1897 = vmatprep.subr.mxu0 0.0
        %1898 = vmatpush1.msra.mxu0 %v1863
        %1899 = vmatprep.subr.mxu0 0.0
        %1900 = vmatpush1.msra.mxu0 %v1861
        %1901 = vmatprep.subr.mxu0 0.0
        %1902 = vmatpush2.msra.mxu0 0.0
        %1903 = vmatprep.subr.mxu0 0.0
        %1904 = vmatpush2.msra.mxu0 0.0
        %1905 = vmatprep.subr.mxu0 0.0
        %1906 = vmatpush2.msra.mxu0 0.0
        %1907 = vmatprep.subr.mxu0 0.0
        %1908 = vmatpush2.msra.mxu0 0.0
        %1909 = vmatprep.subr.mxu0 0.0
        %1910 = vmatpush2.msra.mxu0 0.0
        %1911 = vmatprep.subr.mxu0 0.0
        %1912 = vmatpush2.msra.mxu0 0.0
        %1913 = vmatprep.subr.mxu0 0.0
        %1914 = vmatpush2.msra.mxu0 0.0
        %1915 = vmatprep.subr.mxu0 0.0
        %1916 = vmatpush2.msra.mxu0 0.0
        %1917 = vmatprep.subr.mxu0 0.0
        %1918 = vmatpush2.msra.mxu0 0.0
        %1919 = vmatprep.subr.mxu0 0.0
        %1920 = vmatpush2.msra.mxu0 0.0
        %1921 = vmatprep.subr.mxu0 0.0
        %1922 = vmatpush2.msra.mxu0 0.0
        %1923 = vmatprep.subr.mxu0 0.0
        %1924 = vmatpush2.msra.mxu0 0.0
        %1925 = vmatprep.subr.mxu0 0.0
        %1926 = vmatpush2.msra.mxu0 0.0
        %1927 = vmatprep.subr.mxu0 0.0
        %1928 = vmatpush2.msra.mxu0 0.0
        %1929 = vmatprep.subr.mxu0 0.0
        %1930 = vmatpush2.msra.mxu0 0.0
        %1931 = vmatprep.subr.mxu0 0.0
        %1932 = vmatpush2.msra.mxu0 0.0
        %1933 = vmatprep.mubr.f32.mxu0 0.0
        %1934 = vmatmul.mubr.f32.gmra.mxu0 %v1867
        %v1935 = vpop.f32.mrf.mxu0
        %v1936 = vadd.f32 0.0, %v1935
        %v1937 = vpop.f32.mrf.mxu0
        %1938 = vdwg.mxu0
        %1939 = vrot.lane.b32.xlu0 %v609, 72
        %v1940 = vpop.permute.xlu0 %1939
        %1941 = vrot.lane.b32.xlu0 %v614, 72
        %v1942 = vpop.permute.xlu0 %1941
        %v1946 = vsel %vm428, %v1859, 0
        %1948 = vmatprep.subr.mxu0 0.0
        %1949 = vmatpush1.msra.mxu0 0.0
        %1950 = vmatprep.subr.mxu0 0.0
        %1951 = vmatpush1.msra.mxu0 0.0
        %1952 = vmatprep.subr.mxu0 0.0
        %1953 = vmatpush1.msra.mxu0 0.0
        %1954 = vmatprep.subr.mxu0 0.0
        %1955 = vmatpush1.msra.mxu0 0.0
        %1956 = vmatprep.subr.mxu0 0.0
        %1957 = vmatpush1.msra.mxu0 0.0
        %1958 = vmatprep.subr.mxu0 0.0
        %1959 = vmatpush1.msra.mxu0 0.0
        %1960 = vmatprep.subr.mxu0 0.0
        %1961 = vmatpush1.msra.mxu0 0.0
        %1962 = vmatprep.subr.mxu0 0.0
        %1963 = vmatpush1.msra.mxu0 0.0
        %1964 = vmatprep.subr.mxu0 0.0
        %1965 = vmatpush1.msra.mxu0 0.0
        %1966 = vmatprep.subr.mxu0 0.0
        %1967 = vmatpush1.msra.mxu0 0.0
        %1968 = vmatprep.subr.mxu0 0.0
        %1969 = vmatpush1.msra.mxu0 0.0
        %1970 = vmatprep.subr.mxu0 0.0
        %1971 = vmatpush1.msra.mxu0 0.0
        %1972 = vmatprep.subr.mxu0 0.0
        %1973 = vmatpush1.msra.mxu0 0.0
        %1974 = vmatprep.subr.mxu0 0.0
        %1975 = vmatpush1.msra.mxu0 0.0
        %1976 = vmatprep.subr.mxu0 0.0
        %1977 = vmatpush1.msra.mxu0 %v1942
        %1978 = vmatprep.subr.mxu0 0.0
        %1979 = vmatpush1.msra.mxu0 %v1940
        %1980 = vmatprep.subr.mxu0 0.0
        %1981 = vmatpush2.msra.mxu0 0.0
        %1982 = vmatprep.subr.mxu0 0.0
        %1983 = vmatpush2.msra.mxu0 0.0
        %1984 = vmatprep.subr.mxu0 0.0
        %1985 = vmatpush2.msra.mxu0 0.0
        %1986 = vmatprep.subr.mxu0 0.0
        %1987 = vmatpush2.msra.mxu0 0.0
        %1988 = vmatprep.subr.mxu0 0.0
        %1989 = vmatpush2.msra.mxu0 0.0
        %1990 = vmatprep.subr.mxu0 0.0
        %1991 = vmatpush2.msra.mxu0 0.0
        %1992 = vmatprep.subr.mxu0 0.0
        %1993 = vmatpush2.msra.mxu0 0.0
        %1994 = vmatprep.subr.mxu0 0.0
        %1995 = vmatpush2.msra.mxu0 0.0
        %1996 = vmatprep.subr.mxu0 0.0
        %1997 = vmatpush2.msra.mxu0 0.0
        %1998 = vmatprep.subr.mxu0 0.0
        %1999 = vmatpush2.msra.mxu0 0.0
        %2000 = vmatprep.subr.mxu0 0.0
        %2001 = vmatpush2.msra.mxu0 0.0
        %2002 = vmatprep.subr.mxu0 0.0
        %2003 = vmatpush2.msra.mxu0 0.0
        %2004 = vmatprep.subr.mxu0 0.0
        %2005 = vmatpush2.msra.mxu0 0.0
        %2006 = vmatprep.subr.mxu0 0.0
        %2007 = vmatpush2.msra.mxu0 0.0
        %2008 = vmatprep.subr.mxu0 0.0
        %2009 = vmatpush2.msra.mxu0 0.0
        %2010 = vmatprep.subr.mxu0 0.0
        %2011 = vmatpush2.msra.mxu0 0.0
        %2012 = vmatprep.mubr.f32.mxu0 0.0
        %2013 = vmatmul.mubr.f32.gmra.mxu0 %v1946
        %v2014 = vpop.f32.mrf.mxu0
        %v2015 = vadd.f32 0.0, %v2014
        %v2016 = vpop.f32.mrf.mxu0
        %2017 = vdwg.mxu0
        %2020 = vrot.lane.b32.xlu0 %v1936, 24
        %v2021 = vpop.permute.xlu0 %2020
        %2022 = vrot.lane.b32.xlu0 %v2015, 24
        %v2023 = vpop.permute.xlu0 %2022
        %v2026 = vadd.f32 %v502, %v2021
        %v2027 = vadd.f32 %v507, %v2023
        %v2028 = vsel %vm617, %v958, %v1314
        %v2029 = vsel %vm617, %v959, %v1315
        %v2030 = vsel %vm428, %v2028, %v1670
        %v2031 = vsel %vm428, %v2029, %v1671
        %v2032 = vsel %vm519, %v2030, %v2026
        %v2033 = vsel %vm519, %v2031, %v2027
        %v2034 = vld [vmem:[#allocation10] sm:$0xff]
        %v2035 = vld [vmem:[#allocation10 + $0x8] sm:$0xff]
        %v2036 = vld [vmem:[#allocation10 + $0x10] sm:$0xff]
        %v2037 = vld [vmem:[#allocation10 + $0x18] sm:$0xff]
        %v2039 = vlaneseq
        %v2040 = vshrl.u32 %v2039, 7
        %v2041 = vsub.s32 0, %v2040
        %v2042 = vrot.slane %v419, %v2041
        %vm2044 = vcmask 261120
        %v2046 = vsel %vm2044, %v2032, 0
        %v2049 = vsel %vm2044, %v2033, 0
        %2051 = vmatprep.subr.mxu0 0.0
        %2052 = vmatpush1.msra.mxu0 0.0
        %2053 = vmatprep.subr.mxu0 0.0
        %2054 = vmatpush1.msra.mxu0 0.0
        %2055 = vmatprep.subr.mxu0 0.0
        %2056 = vmatpush1.msra.mxu0 0.0
        %2057 = vmatprep.subr.mxu0 0.0
        %2058 = vmatpush1.msra.mxu0 0.0
        %2059 = vmatprep.subr.mxu0 0.0
        %2060 = vmatpush1.msra.mxu0 0.0
        %2061 = vmatprep.subr.mxu0 0.0
        %2062 = vmatpush1.msra.mxu0 0.0
        %2063 = vmatprep.subr.mxu0 0.0
        %2064 = vmatpush1.msra.mxu0 0.0
        %2065 = vmatprep.subr.mxu0 0.0
        %2066 = vmatpush1.msra.mxu0 0.0
        %2067 = vmatprep.subr.mxu0 0.0
        %2068 = vmatpush1.msra.mxu0 0.0
        %2069 = vmatprep.subr.mxu0 0.0
        %2070 = vmatpush1.msra.mxu0 0.0
        %2071 = vmatprep.subr.mxu0 0.0
        %2072 = vmatpush1.msra.mxu0 0.0
        %2073 = vmatprep.subr.mxu0 0.0
        %2074 = vmatpush1.msra.mxu0 0.0
        %2075 = vmatprep.subr.mxu0 0.0
        %2076 = vmatpush1.msra.mxu0 %v2037
        %2077 = vmatprep.subr.mxu0 0.0
        %2078 = vmatpush1.msra.mxu0 %v2036
        %2079 = vmatprep.subr.mxu0 0.0
        %2080 = vmatpush1.msra.mxu0 %v2035
        %2081 = vmatprep.subr.mxu0 0.0
        %2082 = vmatpush1.msra.mxu0 %v2034
        %2083 = vmatprep.subr.mxu0 0.0
        %2084 = vmatpush2.msra.mxu0 0.0
        %2085 = vmatprep.subr.mxu0 0.0
        %2086 = vmatpush2.msra.mxu0 0.0
        %2087 = vmatprep.subr.mxu0 0.0
        %2088 = vmatpush2.msra.mxu0 0.0
        %2089 = vmatprep.subr.mxu0 0.0
        %2090 = vmatpush2.msra.mxu0 0.0
        %2091 = vmatprep.subr.mxu0 0.0
        %2092 = vmatpush2.msra.mxu0 0.0
        %2093 = vmatprep.subr.mxu0 0.0
        %2094 = vmatpush2.msra.mxu0 0.0
        %2095 = vmatprep.subr.mxu0 0.0
        %2096 = vmatpush2.msra.mxu0 0.0
        %2097 = vmatprep.subr.mxu0 0.0
        %2098 = vmatpush2.msra.mxu0 0.0
        %2099 = vmatprep.subr.mxu0 0.0
        %2100 = vmatpush2.msra.mxu0 0.0
        %2101 = vmatprep.subr.mxu0 0.0
        %2102 = vmatpush2.msra.mxu0 0.0
        %2103 = vmatprep.subr.mxu0 0.0
        %2104 = vmatpush2.msra.mxu0 0.0
        %2105 = vmatprep.subr.mxu0 0.0
        %2106 = vmatpush2.msra.mxu0 0.0
        %2107 = vmatprep.subr.mxu0 0.0
        %2108 = vmatpush2.msra.mxu0 0.0
        %2109 = vmatprep.subr.mxu0 0.0
        %2110 = vmatpush2.msra.mxu0 0.0
        %2111 = vmatprep.subr.mxu0 0.0
        %2112 = vmatpush2.msra.mxu0 0.0
        %2113 = vmatprep.subr.mxu0 0.0
        %2114 = vmatpush2.msra.mxu0 0.0
        %2115 = vmatprep.mubr.f32.mxu0 0.0
        %2116 = vmatmul.mubr.f32.gmra.mxu0 %v2046
        %v2117 = vpop.f32.mrf.mxu0
        %v2118 = vadd.f32 %v2042, %v2117
        %v2119 = vpop.f32.mrf.mxu0
        %2120 = vmatprep.mubr.f32.mxu0 0.0
        %2121 = vmatmul.mubr.f32.gmra.mxu0 %v2049
        %v2122 = vpop.f32.mrf.mxu0
        %v2123 = vadd.f32 %v2042, %v2122
        %v2124 = vpop.f32.mrf.mxu0
        %2125 = vdwg.mxu0
        %v2126 = vmax.f32 %v2118, 0.0
        %v2127 = vmax.f32 %v2123, 0.0
        %v2128 = vadd.f32 %v2032, %v2126
        %v2129 = vadd.f32 %v2033, %v2127
        %2130 = vst.msk [vmem:[%s407] sm:$0xff] %vm2044, %v2128
        %2131 = vst.msk [vmem:[%s407 + $0x8] sm:$0xff] %vm2044, %v2129
        %s2132 = sand.u32 %s215, 1
        %s2133 = scalar_lea.sflag [#allocation4], %s2132
        %s2134 = sand.u32 %s215, 1
        %s2135 = smul.addr %s2134, 16
        %s2136 = scalar_lea.vmem [#allocation11], %s2135
        // Predicated region
        $region73: #{tpu_custom_call.1} parent=51 // pred_check
          %p2137 = pneg %p225
        $region74: #{tpu_custom_call.1} parent=51 // pred_check_branch
          %2139 = sbr.rel (%p2137) target = $region76
        $region75: #{tpu_custom_call.1} parent=51 // pred_region
          %s2140 = smul.u32 2, %s29
          %s2142 = ssub.s32 256, 256
          %2143 = vsyncadd %s2133, %s2142
          %s2144 = smul.addr %s2140, 128
          %s2145 = scalar_lea.hbm %s8, %s2144
          %s2146 = sshll.u32 %s2136, 4
          %s2147 = int_to_ptr.vmem [resolvable:$true] %s2146
          %2152 = dma.vmem_to_hbm [thread:$0]  %s2147, 256, %s2145, %s2133, 128, 128, 8
        $region76: #{tpu_custom_call.1} parent=51 // pred_fallthru
          _
      $region52: #{tpu_custom_call.1} parent=5 // pred_fallthru
        _
      %p2153 = scmp.le.s32.totalorder 2, %s24
      // Predicated region
      $region77: #{tpu_custom_call.1} parent=5 // pred_check
        %p2154 = pneg %p2153
      $region78: #{tpu_custom_call.1} parent=5 // pred_check_branch
        %2156 = sbr.rel (%p2154) target = $region80
      $region79: #{tpu_custom_call.1} parent=5 // pred_region
        %s2157 = ssub.s32 %s24, 2
        // Predicated region
        $region81: #{tpu_custom_call.1} parent=79 // pred_check
          %p2158 = pneg %p231
        $region82: #{tpu_custom_call.1} parent=79 // pred_check_branch
          %2160 = sbr.rel (%p2158) target = $region84
        $region83: #{tpu_custom_call.1} parent=79 // pred_region
          %s2161 = sand.u32 %s216, 1
          %s2162 = scalar_lea.sflag [#allocation4], %s2161
          %s2163 = sand.u32 %s216, 1
          %s2164 = smul.addr %s2163, 16
          %s2165 = scalar_lea.vmem [#allocation11], %s2164
          %2166 = dma.done %s2162, 256
        $region84: #{tpu_custom_call.1} parent=79 // pred_fallthru
          _
      $region80: #{tpu_custom_call.1} parent=5 // pred_fallthru
        _
    $region6: #{tpu_custom_call.1} parent=1 // loop_footer
      %s28 = sadd.s32 1, %s24
    $region7: #{tpu_custom_call.1} parent=1 // loop_footer_branch
      %23 = sbr.rel target = $region3
    $region8: #{tpu_custom_call.1} parent=1 // loop_exit
      _
    %2167 = vsyncpa [#allocation3], 1
    %s2168 = scalar_lea.sflag [#allocation3], 1
    %2169 = vsyncpa %s2168, 1
    %2170 = vsyncpa [#allocation6], 1
    %s2171 = scalar_lea.sflag [#allocation6], 1
    %2172 = vsyncpa %s2171, 1
    %2173 = vsyncpa [#allocation9], 1
    %2174 = vsyncpa [#allocation4], 1
    %s2175 = scalar_lea.sflag [#allocation4], 1
    %2176 = vsyncpa %s2175, 1

</llo_original>
